<compile_context>
chip_gen: v5e
topology: v5e:2x2
jax: 0.10.0
libtpu: 0.0.40
codegen_flags: <defaults>
</compile_context>

<pallas_src>
import math

import jax
import jax.numpy as jnp
from jax.experimental import pallas as pl
from jax.experimental.pallas import tpu as pltpu

N_CLASSES = 10
N_HIDDEN = 800
BN_EPS = 1e-5

LANE = 128
SUBLANE = 8
N_HIDDEN_PAD = 896      # 7 * 128
N_CLASSES_PAD = 128     # lane-dense logits, sliced back to 10 in the wrapper
TM_MAX = 256            # batch tile (MXU-friendly; fits v7x's 64 MiB VMEM easily)
TK_MAX = 512            # flattened-input-feature (K) tile

_INV_SQRT2 = 1.0 / math.sqrt(2.0)


def _round_up(x, m):
    return ((x + m - 1) // m) * m


def _pick_tk(dp):
    """Largest 128-multiple <= TK_MAX that divides the (128-padded) D."""
    for t in (512, 384, 256, 128):
        if t <= TK_MAX and dp % t == 0:
            return t
    return dp


def _make_fc1_kernel(batch, tm):
    """Linear(D->Hp) + exact GELU + streaming per-column sum / sum-of-squares."""

    def kernel(x_ref, w1_ref, b1_ref, h_ref, sum_ref, ssq_ref):
        i = pl.program_id(0)          # batch tile
        k = pl.program_id(1)          # K tile (reduction, innermost)
        nk = pl.num_programs(1)

        @pl.when((i == 0) & (k == 0))
        def _init_stats():
            sum_ref[...] = jnp.zeros_like(sum_ref)
            ssq_ref[...] = jnp.zeros_like(ssq_ref)

        @pl.when(k == 0)
        def _init_acc():
            h_ref[...] = jnp.zeros_like(h_ref)

        # h output block (tm, Hp) is resident across the K axis -> use it as
        # the f32 accumulator directly.
        h_ref[...] += jnp.dot(x_ref[...], w1_ref[...],
                              preferred_element_type=jnp.float32)

        @pl.when(k == nk - 1)
        def _finalize():
            h = h_ref[...] + b1_ref[...]
            # exact (erf) GELU, matching nn.GELU() default.
            h = 0.5 * h * (1.0 + jax.lax.erf(h * _INV_SQRT2))
            # zero padded batch rows so they don't pollute the BN statistics.
            row = jax.lax.broadcasted_iota(jnp.int32, (tm, 1), 0) + i * tm
            h = jnp.where(row < batch, h, 0.0)
            h_ref[...] = h
            # streaming BatchNorm stats (E[x], E[x^2]) accumulated over batch
            # tiles in resident [1, Hp] output blocks.
            sum_ref[...] += jnp.sum(h, axis=0, keepdims=True)
            ssq_ref[...] += jnp.sum(h * h, axis=0, keepdims=True)

    return kernel


def _fc2_kernel(h_ref, scale_ref, shift_ref, w2_ref, b2_ref, o_ref):
    """Fused BN affine (single scale/shift) + Linear(Hp -> 128-padded logits)."""
    hn = h_ref[...] * scale_ref[...] + shift_ref[...]
    o_ref[...] = (
        jnp.dot(hn, w2_ref[...], preferred_element_type=jnp.float32) + b2_ref[...]
    )


def fully_connected_forward(img_batch, padded_params):
    """img_batch: [B, C, H, W] float32 -> logits [B, N_CLASSES] float32."""
    w1p, b1p, gammap, betap, w2p, b2p = padded_params

    b = img_batch.shape[0]
    x = img_batch.reshape(b, -1).astype(jnp.float32)       # nn.Flatten
    d = x.shape[1]
    dp, hp = w1p.shape
    ncp = w2p.shape[1]

    # ---- batch / K tiling ---------------------------------------------------
    bp = _round_up(b, SUBLANE)
    if bp >= TM_MAX:
        tm = TM_MAX
        bp = _round_up(bp, tm)
    else:
        tm = bp
    tk = _pick_tk(dp)
    nb, nk = bp // tm, dp // tk

    x = jnp.pad(x, ((0, bp - b), (0, dp - d)))              # zero pad: no effect

    # ---- pass 1: h = GELU(x @ w1 + b1) + per-column sum / sumsq -------------
    h, col_sum, col_ssq = pl.pallas_call(
        _make_fc1_kernel(b, tm),
        out_shape=(
            jax.ShapeDtypeStruct((bp, hp), jnp.float32),
            jax.ShapeDtypeStruct((1, hp), jnp.float32),
            jax.ShapeDtypeStruct((1, hp), jnp.float32),
        ),
        grid=(nb, nk),
        in_specs=[
            pl.BlockSpec((tm, tk), lambda i, k: (i, k)),    # x tile
            pl.BlockSpec((tk, hp), lambda i, k: (k, 0)),    # w1 K-slab
            pl.BlockSpec((1, hp), lambda i, k: (0, 0)),     # b1 (resident)
        ],
        out_specs=(
            pl.BlockSpec((tm, hp), lambda i, k: (i, 0)),    # h / accumulator
            pl.BlockSpec((1, hp), lambda i, k: (0, 0)),     # sum accumulator
            pl.BlockSpec((1, hp), lambda i, k: (0, 0)),     # sumsq accumulator
        ),
        # Both axes "arbitrary": the batch axis carries the BN sum/sumsq
        # reduction (resident accumulator outputs), the K axis the matmul acc.
        compiler_params=pltpu.CompilerParams(
            dimension_semantics=("arbitrary", "arbitrary")),
    )(x, w1p, b1p)

    # ---- BN batch stats -> fused per-column scale/shift (tiny [1, Hp] work) --
    mean = col_sum / b
    var = jnp.maximum(col_ssq / b - mean * mean, 0.0)       # biased variance
    inv = jax.lax.rsqrt(var + BN_EPS)
    scale = gammap * inv                                    # 0 in padded columns
    shift = betap - mean * scale

    # ---- pass 2: logits = (h * scale + shift) @ w2 + b2 (lane-dense output) --
    out = pl.pallas_call(
        _fc2_kernel,
        out_shape=jax.ShapeDtypeStruct((bp, ncp), jnp.float32),
        grid=(nb,),
        in_specs=[
            pl.BlockSpec((tm, hp), lambda i: (i, 0)),       # h tile
            pl.BlockSpec((1, hp), lambda i: (0, 0)),        # scale
            pl.BlockSpec((1, hp), lambda i: (0, 0)),        # shift
            pl.BlockSpec((hp, ncp), lambda i: (0, 0)),      # w2 (resident)
            pl.BlockSpec((1, ncp), lambda i: (0, 0)),       # b2
        ],
        out_specs=pl.BlockSpec((tm, ncp), lambda i: (i, 0)),
        compiler_params=pltpu.CompilerParams(
            dimension_semantics=("parallel",)),             # rows independent
    )(h, scale, shift, w2p, b2p)

    return out[:b, :N_CLASSES]


def init_params(key, d_in):
    """PyTorch-style (kaiming-uniform) init, unpadded (logical) shapes."""
    k1, k2, k3, k4 = jax.random.split(key, 4)

    bound1 = 1.0 / math.sqrt(d_in)
    w1 = jax.random.uniform(k1, (d_in, N_HIDDEN), jnp.float32, -bound1, bound1)
    b1 = jax.random.uniform(k2, (1, N_HIDDEN), jnp.float32, -bound1, bound1)

    gamma = jnp.ones((1, N_HIDDEN), jnp.float32)
    beta = jnp.zeros((1, N_HIDDEN), jnp.float32)

    bound2 = 1.0 / math.sqrt(N_HIDDEN)
    w2 = jax.random.uniform(k3, (N_HIDDEN, N_CLASSES), jnp.float32, -bound2, bound2)
    b2 = jax.random.uniform(k4, (1, N_CLASSES), jnp.float32, -bound2, bound2)

    return (w1, b1, gamma, beta, w2, b2)


def pad_params(params):
    """One-time padding to lane-dense kernel shapes (done at init time).

    Padded hidden columns get gamma=0 / beta=0 and zero w2 rows, padded D gets
    zero w1 rows, padded logit columns get zero w2 columns / b2 -> padding
    contributes exactly zero to the real logits.
    """
    w1, b1, gamma, beta, w2, b2 = params
    d_in = w1.shape[0]
    dp = _round_up(d_in, LANE)
    hp = N_HIDDEN_PAD
    w1p = jnp.pad(w1, ((0, dp - d_in), (0, hp - N_HIDDEN)))
    b1p = jnp.pad(b1, ((0, 0), (0, hp - N_HIDDEN)))
    gammap = jnp.pad(gamma, ((0, 0), (0, hp - N_HIDDEN)))
    betap = jnp.pad(beta, ((0, 0), (0, hp - N_HIDDEN)))
    w2p = jnp.pad(w2, ((0, hp - N_HIDDEN), (0, N_CLASSES_PAD - N_CLASSES)))
    b2p = jnp.pad(b2, ((0, 0), (0, N_CLASSES_PAD - N_CLASSES)))
    return (w1p, b1p, gammap, betap, w2p, b2p)


def reference_forward(img_batch, params):
    """Pure-JAX reference of the PyTorch forward (unpadded params)."""
    w1, b1, gamma, beta, w2, b2 = params
    x = img_batch.reshape(img_batch.shape[0], -1)
    h = x @ w1 + b1
    h = 0.5 * h * (1.0 + jax.lax.erf(h / math.sqrt(2.0)))
    mean = jnp.mean(h, axis=0, keepdims=True)
    var = jnp.mean((h - mean) ** 2, axis=0, keepdims=True)
    h = (h - mean) / jnp.sqrt(var + BN_EPS)
    h = h * gamma + beta
    return h @ w2 + b2


if __name__ == "__main__":
    key = jax.random.PRNGKey(0)
    k_img, k_params = jax.random.split(key)

    # Small example image batch: [B, C, H, W] = [2, 4, 16, 16] -> D = 1024.
    B, C, H, W = 2, 4, 16, 16
    img_batch = jax.random.normal(k_img, (B, C, H, W), dtype=jnp.float32)

    params = init_params(k_params, C * H * W)
    padded_params = pad_params(params)

    out = fully_connected_forward(img_batch, padded_params)
    out = jax.block_until_ready(out)

    ref = reference_forward(img_batch, params)
    assert out.shape == (B, N_CLASSES)
    # Only numerics difference vs the reference: streaming BN variance
    # (E[x^2] - E[x]^2) and tiled f32 matmul accumulation order.
    assert jnp.allclose(out, ref, atol=1e-3, rtol=1e-3), "mismatch vs reference"

    print("KERNEL_OK")
</pallas_src>

<mosaic_0001>
module attributes {stable_mosaic.version = 11 : i64} {
  func.func @kernel(%arg0: i32, %arg1: i32, %arg2: memref<8x512xf32, #tpu.memory_space<vmem>>, %arg3: memref<512x896xf32, #tpu.memory_space<vmem>>, %arg4: memref<1x896xf32, #tpu.memory_space<vmem>>, %arg5: memref<8x896xf32, #tpu.memory_space<vmem>>, %arg6: memref<1x896xf32, #tpu.memory_space<vmem>>, %arg7: memref<1x896xf32, #tpu.memory_space<vmem>>) attributes {dimension_semantics = [#tpu.dimension_semantics<arbitrary>, #tpu.dimension_semantics<arbitrary>], iteration_bounds = array<i64: 1, 2>, scalar_prefetch = 0 : i64, scratch_operands = 0 : i64, tpu.core_type = #tpu.core_type<tc>, window_params = [{transform_indices = @transform_0, window_bounds = array<i64: 8, 512>}, {transform_indices = @transform_1, window_bounds = array<i64: 512, 896>}, {pipeline_mode = #tpu.pipeline_mode<synchronous>, transform_indices = @transform_2, window_bounds = array<i64: 1, 896>}, {transform_indices = @transform_3, window_bounds = array<i64: 8, 896>}, {pipeline_mode = #tpu.pipeline_mode<synchronous>, transform_indices = @transform_4, window_bounds = array<i64: 1, 896>}, {pipeline_mode = #tpu.pipeline_mode<synchronous>, transform_indices = @transform_5, window_bounds = array<i64: 1, 896>}]} {
    %c0_i32 = arith.constant 0 : i32
    %0 = arith.cmpi eq, %arg0, %c0_i32 : i32
    %c0_i32_0 = arith.constant 0 : i32
    %1 = arith.cmpi eq, %arg1, %c0_i32_0 : i32
    %2 = arith.andi %0, %1 : i1
    %3 = arith.extui %2 : i1 to i32
    %c0_i32_1 = arith.constant 0 : i32
    %4 = arith.cmpi ne, %3, %c0_i32_1 : i32
    scf.if %4 {
      %cst_12 = arith.constant 0.000000e+00 : f32
      %17 = vector.broadcast %cst_12 : f32 to vector<1x896xf32>
      %c0_13 = arith.constant 0 : index
      %c0_14 = arith.constant 0 : index
      %18 = vector.load %arg6[%c0_13, %c0_14] : memref<1x896xf32, #tpu.memory_space<vmem>>, vector<1x896xf32>
      tpu.vector_store %arg6[%c0_13, %c0_14], %17 {strides = array<i32>} : memref<1x896xf32, #tpu.memory_space<vmem>>, vector<1x896xf32>,
      %cst_15 = arith.constant 0.000000e+00 : f32
      %19 = vector.broadcast %cst_15 : f32 to vector<1x896xf32>
      %c0_16 = arith.constant 0 : index
      %c0_17 = arith.constant 0 : index
      %20 = vector.load %arg7[%c0_16, %c0_17] : memref<1x896xf32, #tpu.memory_space<vmem>>, vector<1x896xf32>
      tpu.vector_store %arg7[%c0_16, %c0_17], %19 {strides = array<i32>} : memref<1x896xf32, #tpu.memory_space<vmem>>, vector<1x896xf32>,
    } else {
    }
    %c0_i32_2 = arith.constant 0 : i32
    %5 = arith.cmpi eq, %arg1, %c0_i32_2 : i32
    %6 = arith.extui %5 : i1 to i32
    %c0_i32_3 = arith.constant 0 : i32
    %7 = arith.cmpi ne, %6, %c0_i32_3 : i32
    scf.if %7 {
      %cst_12 = arith.constant 0.000000e+00 : f32
      %17 = vector.broadcast %cst_12 : f32 to vector<8x896xf32>
      %c0_13 = arith.constant 0 : index
      %c0_14 = arith.constant 0 : index
      %18 = vector.load %arg5[%c0_13, %c0_14] : memref<8x896xf32, #tpu.memory_space<vmem>>, vector<8x896xf32>
      tpu.vector_store %arg5[%c0_13, %c0_14], %17 {strides = array<i32>} : memref<8x896xf32, #tpu.memory_space<vmem>>, vector<8x896xf32>,
    } else {
    }
    %c0 = arith.constant 0 : index
    %c0_4 = arith.constant 0 : index
    %8 = vector.load %arg5[%c0, %c0_4] : memref<8x896xf32, #tpu.memory_space<vmem>>, vector<8x896xf32>
    %c0_5 = arith.constant 0 : index
    %c0_6 = arith.constant 0 : index
    %9 = vector.load %arg2[%c0_5, %c0_6] : memref<8x512xf32, #tpu.memory_space<vmem>>, vector<8x512xf32>
    %c0_7 = arith.constant 0 : index
    %c0_8 = arith.constant 0 : index
    %10 = vector.load %arg3[%c0_7, %c0_8] : memref<512x896xf32, #tpu.memory_space<vmem>>, vector<512x896xf32>
    %cst = arith.constant dense<0.000000e+00> : vector<8x896xf32>
    %11 = tpu.matmul %9, %10, %cst {dimension_numbers = #tpu.dot_dimension_numbers<[1], [0], [0], [1], [0, 0, 1, 1], [], []>} : vector<8x512xf32>, vector<512x896xf32>, vector<8x896xf32> -> vector<8x896xf32>
    %12 = arith.addf %8, %11 : vector<8x896xf32>
    %c0_9 = arith.constant 0 : index
    %c0_10 = arith.constant 0 : index
    %13 = vector.load %arg5[%c0_9, %c0_10] : memref<8x896xf32, #tpu.memory_space<vmem>>, vector<8x896xf32>
    tpu.vector_store %arg5[%c0_9, %c0_10], %12 {strides = array<i32>} : memref<8x896xf32, #tpu.memory_space<vmem>>, vector<8x896xf32>,
    %c1_i32 = arith.constant 1 : i32
    %14 = arith.cmpi eq, %arg1, %c1_i32 : i32
    %15 = arith.extui %14 : i1 to i32
    %c0_i32_11 = arith.constant 0 : i32
    %16 = arith.cmpi ne, %15, %c0_i32_11 : i32
    scf.if %16 {
      %c0_12 = arith.constant 0 : index
      %c0_13 = arith.constant 0 : index
      %17 = vector.load %arg5[%c0_12, %c0_13] : memref<8x896xf32, #tpu.memory_space<vmem>>, vector<8x896xf32>
      %c0_14 = arith.constant 0 : index
      %c0_15 = arith.constant 0 : index
      %18 = vector.load %arg4[%c0_14, %c0_15] : memref<1x896xf32, #tpu.memory_space<vmem>>, vector<1x896xf32>
      %19 = vector.broadcast %18 : vector<1x896xf32> to vector<8x896xf32>
      %20 = arith.addf %17, %19 : vector<8x896xf32>
      %cst_16 = arith.constant 5.000000e-01 : f32
      %21 = vector.broadcast %cst_16 : f32 to vector<8x896xf32>
      %22 = arith.mulf %21, %20 : vector<8x896xf32>
      %cst_17 = arith.constant 0.707106769 : f32
      %23 = vector.broadcast %cst_17 : f32 to vector<8x896xf32>
      %24 = arith.mulf %20, %23 : vector<8x896xf32>
      %25 = math.erf %24 : vector<8x896xf32>
      %cst_18 = arith.constant 1.000000e+00 : f32
      %26 = vector.broadcast %cst_18 : f32 to vector<8x896xf32>
      %27 = arith.addf %26, %25 : vector<8x896xf32>
      %28 = arith.mulf %22, %27 : vector<8x896xf32>
      %29 = tpu.iota {dimensions = array<i32: 0>} : vector<8x1xi32>
      %c8_i32 = arith.constant 8 : i32
      %30 = arith.muli %arg0, %c8_i32 : i32
      %31 = vector.broadcast %30 : i32 to vector<8x1xi32>
      %32 = arith.addi %29, %31 : vector<8x1xi32>
      %c2_i32 = arith.constant 2 : i32
      %33 = vector.broadcast %c2_i32 : i32 to vector<8x1xi32>
      %34 = arith.cmpi slt, %32, %33 : vector<8x1xi32>
      %cst_19 = arith.constant 0.000000e+00 : f32
      %35 = vector.shape_cast %34 : vector<8x1xi1> to vector<8x1xi1>
      %36 = vector.broadcast %35 : vector<8x1xi1> to vector<8x896xi1>
      %37 = vector.broadcast %cst_19 : f32 to vector<8x896xf32>
      %38 = arith.select %36, %28, %37 : vector<8x896xi1>, vector<8x896xf32>
      %c0_20 = arith.constant 0 : index
      %c0_21 = arith.constant 0 : index
      %39 = vector.load %arg5[%c0_20, %c0_21] : memref<8x896xf32, #tpu.memory_space<vmem>>, vector<8x896xf32>
      tpu.vector_store %arg5[%c0_20, %c0_21], %38 {strides = array<i32>} : memref<8x896xf32, #tpu.memory_space<vmem>>, vector<8x896xf32>,
      %c0_22 = arith.constant 0 : index
      %c0_23 = arith.constant 0 : index
      %40 = vector.load %arg6[%c0_22, %c0_23] : memref<1x896xf32, #tpu.memory_space<vmem>>, vector<1x896xf32>
      %cst_24 = arith.constant dense<0.000000e+00> : vector<896xf32>
      %41 = vector.multi_reduction <add>, %38, %cst_24 [0] : vector<8x896xf32> to vector<896xf32>
      %42 = vector.shape_cast %41 : vector<896xf32> to vector<1x896xf32>
      %43 = arith.addf %40, %42 : vector<1x896xf32>
      %c0_25 = arith.constant 0 : index
      %c0_26 = arith.constant 0 : index
      %44 = vector.load %arg6[%c0_25, %c0_26] : memref<1x896xf32, #tpu.memory_space<vmem>>, vector<1x896xf32>
      tpu.vector_store %arg6[%c0_25, %c0_26], %43 {strides = array<i32>} : memref<1x896xf32, #tpu.memory_space<vmem>>, vector<1x896xf32>,
      %c0_27 = arith.constant 0 : index
      %c0_28 = arith.constant 0 : index
      %45 = vector.load %arg7[%c0_27, %c0_28] : memref<1x896xf32, #tpu.memory_space<vmem>>, vector<1x896xf32>
      %46 = arith.mulf %38, %38 : vector<8x896xf32>
      %cst_29 = arith.constant dense<0.000000e+00> : vector<896xf32>
      %47 = vector.multi_reduction <add>, %46, %cst_29 [0] : vector<8x896xf32> to vector<896xf32>
      %48 = vector.shape_cast %47 : vector<896xf32> to vector<1x896xf32>
      %49 = arith.addf %45, %48 : vector<1x896xf32>
      %c0_30 = arith.constant 0 : index
      %c0_31 = arith.constant 0 : index
      %50 = vector.load %arg7[%c0_30, %c0_31] : memref<1x896xf32, #tpu.memory_space<vmem>>, vector<1x896xf32>
      tpu.vector_store %arg7[%c0_30, %c0_31], %49 {strides = array<i32>} : memref<1x896xf32, #tpu.memory_space<vmem>>, vector<1x896xf32>,
    } else {
    }
    return
  }
  func.func @transform_0(%arg0: i32, %arg1: i32) -> (i32, i32) {
    %c0_i32 = arith.constant 0 : i32
    return %arg0, %arg1 : i32, i32
  }
  func.func @transform_1(%arg0: i32, %arg1: i32) -> (i32, i32) {
    %c0_i32 = arith.constant 0 : i32
    %c0_i32_0 = arith.constant 0 : i32
    return %arg1, %c0_i32 : i32, i32
  }
  func.func @transform_2(%arg0: i32, %arg1: i32) -> (i32, i32) {
    %c0_i32 = arith.constant 0 : i32
    %c0_i32_0 = arith.constant 0 : i32
    %c0_i32_1 = arith.constant 0 : i32
    return %c0_i32, %c0_i32_0 : i32, i32
  }
  func.func @transform_3(%arg0: i32, %arg1: i32) -> (i32, i32) {
    %c0_i32 = arith.constant 0 : i32
    %c0_i32_0 = arith.constant 0 : i32
    return %arg0, %c0_i32 : i32, i32
  }
  func.func @transform_4(%arg0: i32, %arg1: i32) -> (i32, i32) {
    %c0_i32 = arith.constant 0 : i32
    %c0_i32_0 = arith.constant 0 : i32
    %c0_i32_1 = arith.constant 0 : i32
    return %c0_i32, %c0_i32_0 : i32, i32
  }
  func.func @transform_5(%arg0: i32, %arg1: i32) -> (i32, i32) {
    %c0_i32 = arith.constant 0 : i32
    %c0_i32_0 = arith.constant 0 : i32
    %c0_i32_1 = arith.constant 0 : i32
    return %c0_i32, %c0_i32_0 : i32, i32
  }
}

</mosaic_0001>

<llo_original>
// kernel: tpu_custom_call.1
$region0: #{tpu_custom_call.1}
  #allocation0 [shape = 'u32[]', space=smem, size = 0x4, offset = 0x4, fixed_abs, tag = 'smem constant byte address 0x4 - core index']
  #allocation1 [shape = 'u32[72,128]{1,0:T(1,128)}', space=vmem, size = 0x9000, scoped, tag = 'internal scratch']
  %s0 = inlined_call_operand.hbm [shape: f32[8,1024], index: 0, kind: input, shape index: {}]
  %s1 = inlined_call_operand.hbm [shape: f32[1024,896], index: 1, kind: input, shape index: {}]
  %s2 = inlined_call_operand.hbm [shape: f32[1,896], index: 2, kind: input, shape index: {}]
  %s3 = inlined_call_operand.hbm [shape: f32[8,896], index: 3, kind: output, shape index: {0}]
  %s4 = inlined_call_operand.hbm [shape: f32[1,896], index: 4, kind: output, shape index: {1}]
  %s5 = inlined_call_operand.hbm [shape: f32[1,896], index: 5, kind: output, shape index: {2}]
  %6 = xla_tuple %s3, %s4, %s5
  %s7 = sld [smem:[#allocation0]]
  $region85: #{tpu_custom_call.1} parent=0
    _
  %s9 = ssub.s32 1, %s7
  %s10 = scalar_select 0, %s9, %s7
  $region1: #{tpu_custom_call.1} parent=0
    #allocation2 [shape = 'u8[32768]{0}', space=vmem, size = 0x8000, scoped, tag = 'input window, operand 0']
    #allocation3 [shape = 's32[2]{0}', space=sflag, size = 0x8, scoped, tag = 'scoped memory for tpu_custom_call.1']
    #allocation4 [shape = 's32[2]{0}', space=sflag, size = 0x8, scoped, tag = 'scoped memory for tpu_custom_call.1']
    #allocation5 [shape = 'u8[3670016]{0}', space=vmem, size = 0x380000, scoped, tag = 'input window, operand 1']
    #allocation6 [shape = 's32[2]{0}', space=sflag, size = 0x8, scoped, tag = 'scoped memory for tpu_custom_call.1']
    #allocation7 [shape = 'u8[3584]{0}', space=vmem, size = 0x1000, scoped, tag = 'input window, operand 2, single buffered']
    #allocation8 [shape = 'u8[28672]{0}', space=vmem, size = 0x7000, scoped, tag = 'output window, operand 0, single buffered']
    #allocation9 [shape = 'u8[3584]{0}', space=vmem, size = 0x1000, scoped, tag = 'output window, operand 1, single buffered']
    #allocation10 [shape = 's32[1]{0}', space=sflag, size = 0x4, scoped, tag = 'scoped memory for tpu_custom_call.1']
    #allocation11 [shape = 'u8[3584]{0}', space=vmem, size = 0x1000, scoped, tag = 'output window, operand 2, single buffered']
    %11 = vsyncpa [#allocation3], 0
    %s12 = scalar_lea.sflag [#allocation3], 1
    %13 = vsyncpa %s12, 0
    %14 = vsyncpa [#allocation6], 0
    %s15 = scalar_lea.sflag [#allocation6], 1
    %16 = vsyncpa %s15, 0
    %17 = vsyncpa [#allocation4], 0
    %18 = vsyncpa [#allocation10], 0
    loop: start=0, step=1, limit=4
    $region2: #{tpu_custom_call.1} parent=1 // loop_pre_header
      _
    $region3: #{tpu_custom_call.1} parent=1 // loop_header
      %s20 = sphi 0, %s24
      %p21 = scmp.ge.s32.totalorder %s20, 4
      %s27 = sphi 0, %s39
      %s28 = sphi 0, %s35
      %s29 = sphi 0, %s27
      %s30 = sphi 0, %s28
      %s31 = sphi 0, %s29
      %s32 = sphi 0, %s30
      %s44 = sphi 0, %s46
      %s47 = sphi 0, %s44
      %s48 = sphi 0, %s47
      %s64 = sphi 0, %s48
      %s70 = sphi 0, %s72
      %s73 = sphi 0, %s70
      %s74 = sphi 0, %s73
      %s90 = sphi 0, %s74
      %s94 = sphi 0, %s94
      %s96 = sphi 0, %s94
      %s97 = sphi 0, %s96
      %s111 = sphi 0, %s97
      %s117 = sphi 0, %s119
      %s120 = sphi 0, %s117
      %s121 = sphi 0, %s120
      %s137 = sphi 0, %s121
      %s141 = sphi 0, %s141
      %s143 = sphi 0, %s141
      %s144 = sphi 0, %s143
      %s158 = sphi 0, %s144
      %s162 = sphi 0, %s162
      %s164 = sphi 0, %s162
      %s165 = sphi 0, %s164
      %s179 = sphi 0, %s165
    $region4: #{tpu_custom_call.1} parent=1 // loop_header_branch
      %23 = sbr.rel (%p21) target = $region8
    $region5: #{tpu_custom_call.1} parent=1 // loop_body
      %s25 = ssub.s32 %s20, 1
      %s26 = ssub.s32 %s20, 2
      %s33 = sadd.s32 1, %s28
      %p34 = scmp.ge.s32.totalorder %s33, 2
      %s35 = scalar_select %p34, 0, %s33
      %s36 = sadd.s32 1, %s27
      %s37 = scalar_select %p34, %s36, %s27
      %p38 = scmp.ge.s32.totalorder %s37, 1
      %s39 = scalar_select %p38, 0, %s37
      %s40 = ssub.s32 %s27, %s39
      %s41 = ssub.s32 %s28, %s35
      %s42 = sor.u32 %s40, %s41
      %p43 = scmp.eq.s32.totalorder %s42, 0
      %s45 = sadd.s32 %s44, 1
      %s46 = scalar_select %p43, %s44, %s45
      %p49 = pneg %p43
      %p50 = scmp.eq.s32.totalorder %s20, 1
      %p51 = por %p49, %p50
      %p52 = scmp.ne.s32.totalorder %s44, %s47
      %p53 = scmp.eq.s32.totalorder %s20, 0
      %p54 = por %p52, %p53
      %p55 = scmp.ne.s32.totalorder %s44, %s47
      %p56 = scmp.eq.s32.totalorder %s25, 1
      %p57 = por %p55, %p56
      %p58 = scmp.ne.s32.totalorder %s47, %s48
      %p59 = scmp.eq.s32.totalorder %s25, 0
      %p60 = por %p58, %p59
      %p61 = scmp.ne.s32.totalorder %s47, %s48
      %p62 = scmp.eq.s32.totalorder %s26, 1
      %p63 = por %p61, %p62
      %p65 = scmp.ne.s32.totalorder %s48, %s64
      %p66 = scmp.eq.s32.totalorder %s26, 0
      %p67 = por %p65, %p66
      %s68 = ssub.s32 %s28, %s35
      %p69 = scmp.eq.s32.totalorder %s68, 0
      %s71 = sadd.s32 %s70, 1
      %s72 = scalar_select %p69, %s70, %s71
      %p75 = pneg %p69
      %p76 = scmp.eq.s32.totalorder %s20, 1
      %p77 = por %p75, %p76
      %p78 = scmp.ne.s32.totalorder %s70, %s73
      %p79 = scmp.eq.s32.totalorder %s20, 0
      %p80 = por %p78, %p79
      %p81 = scmp.ne.s32.totalorder %s70, %s73
      %p82 = scmp.eq.s32.totalorder %s25, 1
      %p83 = por %p81, %p82
      %p84 = scmp.ne.s32.totalorder %s73, %s74
      %p85 = scmp.eq.s32.totalorder %s25, 0
      %p86 = por %p84, %p85
      %p87 = scmp.ne.s32.totalorder %s73, %s74
      %p88 = scmp.eq.s32.totalorder %s26, 1
      %p89 = por %p87, %p88
      %p91 = scmp.ne.s32.totalorder %s74, %s90
      %p92 = scmp.eq.s32.totalorder %s26, 0
      %p93 = por %p91, %p92
      %s95 = sadd.s32 %s94, 1
      %p98 = scmp.eq.s32.totalorder %s20, 1
      %p99 = scmp.ne.s32.totalorder %s94, %s96
      %p100 = scmp.eq.s32.totalorder %s20, 0
      %p101 = por %p99, %p100
      %p102 = scmp.ne.s32.totalorder %s94, %s96
      %p103 = scmp.eq.s32.totalorder %s25, 1
      %p104 = por %p102, %p103
      %p105 = scmp.ne.s32.totalorder %s96, %s97
      %p106 = scmp.eq.s32.totalorder %s25, 0
      %p107 = por %p105, %p106
      %p108 = scmp.ne.s32.totalorder %s96, %s97
      %p109 = scmp.eq.s32.totalorder %s26, 1
      %p110 = por %p108, %p109
      %p112 = scmp.ne.s32.totalorder %s97, %s111
      %p113 = scmp.eq.s32.totalorder %s26, 0
      %p114 = por %p112, %p113
      %s115 = ssub.s32 %s27, %s39
      %p116 = scmp.eq.s32.totalorder %s115, 0
      %s118 = sadd.s32 %s117, 1
      %s119 = scalar_select %p116, %s117, %s118
      %p122 = pneg %p116
      %p123 = scmp.eq.s32.totalorder %s20, 1
      %p124 = por %p122, %p123
      %p125 = scmp.ne.s32.totalorder %s117, %s120
      %p126 = scmp.eq.s32.totalorder %s20, 0
      %p127 = por %p125, %p126
      %p128 = scmp.ne.s32.totalorder %s117, %s120
      %p129 = scmp.eq.s32.totalorder %s25, 1
      %p130 = por %p128, %p129
      %p131 = scmp.ne.s32.totalorder %s120, %s121
      %p132 = scmp.eq.s32.totalorder %s25, 0
      %p133 = por %p131, %p132
      %p134 = scmp.ne.s32.totalorder %s120, %s121
      %p135 = scmp.eq.s32.totalorder %s26, 1
      %p136 = por %p134, %p135
      %p138 = scmp.ne.s32.totalorder %s121, %s137
      %p139 = scmp.eq.s32.totalorder %s26, 0
      %p140 = por %p138, %p139
      %s142 = sadd.s32 %s141, 1
      %p145 = scmp.eq.s32.totalorder %s20, 1
      %p146 = scmp.ne.s32.totalorder %s141, %s143
      %p147 = scmp.eq.s32.totalorder %s20, 0
      %p148 = por %p146, %p147
      %p149 = scmp.ne.s32.totalorder %s141, %s143
      %p150 = scmp.eq.s32.totalorder %s25, 1
      %p151 = por %p149, %p150
      %p152 = scmp.ne.s32.totalorder %s143, %s144
      %p153 = scmp.eq.s32.totalorder %s25, 0
      %p154 = por %p152, %p153
      %p155 = scmp.ne.s32.totalorder %s143, %s144
      %p156 = scmp.eq.s32.totalorder %s26, 1
      %p157 = por %p155, %p156
      %p159 = scmp.ne.s32.totalorder %s144, %s158
      %p160 = scmp.eq.s32.totalorder %s26, 0
      %p161 = por %p159, %p160
      %s163 = sadd.s32 %s162, 1
      %p166 = scmp.eq.s32.totalorder %s20, 1
      %p167 = scmp.ne.s32.totalorder %s162, %s164
      %p168 = scmp.eq.s32.totalorder %s20, 0
      %p169 = por %p167, %p168
      %p170 = scmp.ne.s32.totalorder %s162, %s164
      %p171 = scmp.eq.s32.totalorder %s25, 1
      %p172 = por %p170, %p171
      %p173 = scmp.ne.s32.totalorder %s164, %s165
      %p174 = scmp.eq.s32.totalorder %s25, 0
      %p175 = por %p173, %p174
      %p176 = scmp.ne.s32.totalorder %s164, %s165
      %p177 = scmp.eq.s32.totalorder %s26, 1
      %p178 = por %p176, %p177
      %p180 = scmp.ne.s32.totalorder %s165, %s179
      %p181 = scmp.eq.s32.totalorder %s26, 0
      %p182 = por %p180, %p181
      %p183 = scmp.le.s32.totalorder 1, %s20
      %p184 = scmp.lt.s32.totalorder %s20, 3
      %p185 = pnand %p183, %p184
      %p186 = pneg %p185
      // Predicated region
      $region9: #{tpu_custom_call.1} parent=5 // pred_check
        _
      $region10: #{tpu_custom_call.1} parent=5 // pred_check_branch
        %188 = sbr.rel (%p185) target = $region12
      $region11: #{tpu_custom_call.1} parent=5 // pred_region
        %s189 = ssub.s32 %s20, 1
        // Predicated region
        $region13: #{tpu_custom_call.1} parent=11 // pred_check
          %p190 = pneg %p107
        $region14: #{tpu_custom_call.1} parent=11 // pred_check_branch
          %192 = sbr.rel (%p190) target = $region16
        $region15: #{tpu_custom_call.1} parent=11 // pred_region
          %194 = vsyncadd [#allocation6], 0
          %s196 = sshll.u32 %s2, 4
          %s197 = int_to_ptr.hbm [resolvable:$true] %s196
          %s198 = sshll.u32 [#allocation7], 4
          %s199 = int_to_ptr.vmem [resolvable:$true] %s198
          %201 = dma.hbm_to_vmem [thread:$0]  %s197, 112, %s199, [#allocation6]
        $region16: #{tpu_custom_call.1} parent=11 // pred_fallthru
          _
      $region12: #{tpu_custom_call.1} parent=5 // pred_fallthru
        _
      %p202 = scmp.lt.s32.totalorder %s20, 2
      // Predicated region
      $region17: #{tpu_custom_call.1} parent=5 // pred_check
        %p203 = pneg %p202
      $region18: #{tpu_custom_call.1} parent=5 // pred_check_branch
        %205 = sbr.rel (%p203) target = $region20
      $region19: #{tpu_custom_call.1} parent=5 // pred_region
        // Predicated region
        $region21: #{tpu_custom_call.1} parent=19 // pred_check
          %p206 = pneg %p54
        $region22: #{tpu_custom_call.1} parent=19 // pred_check_branch
          %208 = sbr.rel (%p206) target = $region24
        $region23: #{tpu_custom_call.1} parent=19 // pred_region
          %s209 = sand.u32 %s44, 1
          %s210 = scalar_lea.sflag [#allocation3], %s209
          %s211 = sand.u32 %s44, 1
          %s212 = smul.addr %s211, 32
          %s213 = scalar_lea.vmem [#allocation2], %s212
          %s214 = smul.u32 4, %s28
          %216 = vsyncadd %s210, 0
          %s217 = smul.addr %s27, 8
          %s218 = sadd.s32 %s214, %s217
          %s219 = smul.addr %s218, 8
          %s220 = scalar_lea.hbm %s0, %s219
          %s222 = sshll.u32 %s220, 4
          %s223 = int_to_ptr.hbm [resolvable:$true] %s222
          %s224 = sshll.u32 %s213, 4
          %s225 = int_to_ptr.vmem [resolvable:$true] %s224
          %227 = dma.hbm_to_vmem [thread:$0]  %s223, 512, %s225, %s210
        $region24: #{tpu_custom_call.1} parent=19 // pred_fallthru
          _
        // Predicated region
        $region25: #{tpu_custom_call.1} parent=19 // pred_check
          %p228 = pneg %p80
        $region26: #{tpu_custom_call.1} parent=19 // pred_check_branch
          %230 = sbr.rel (%p228) target = $region28
        $region27: #{tpu_custom_call.1} parent=19 // pred_region
          %s231 = sand.u32 %s20, 1
          %s232 = scalar_lea.sflag [#allocation6], %s231
          %s233 = sand.u32 %s70, 1
          %s234 = smul.addr %s233, 3584
          %s235 = scalar_lea.vmem [#allocation5], %s234
          %s236 = smul.u32 64, %s28
          %238 = vsyncadd %s232, 0
          %s239 = smul.addr %s236, 7
          %s240 = smul.addr %s239, 8
          %s241 = scalar_lea.hbm %s1, %s240
          %s242 = sshll.u32 %s241, 4
          %s243 = int_to_ptr.hbm [resolvable:$true] %s242
          %s244 = sshll.u32 %s235, 4
          %s245 = int_to_ptr.vmem [resolvable:$true] %s244
          %250 = dma.hbm_to_vmem [thread:$0]  %s243, 57344, %s245, %s232, 896, 896, 56
        $region28: #{tpu_custom_call.1} parent=19 // pred_fallthru
          _
      $region20: #{tpu_custom_call.1} parent=5 // pred_fallthru
        _
      %p251 = scmp.le.s32.totalorder 1, %s20
      %p252 = scmp.lt.s32.totalorder %s20, 3
      %p253 = pnand %p251, %p252
      %p254 = pneg %p253
      // Predicated region
      $region29: #{tpu_custom_call.1} parent=5 // pred_check
        _
      $region30: #{tpu_custom_call.1} parent=5 // pred_check_branch
        %256 = sbr.rel (%p253) target = $region32
      $region31: #{tpu_custom_call.1} parent=5 // pred_region
        %s257 = ssub.s32 %s20, 1
        %s258 = sand.u32 %s47, 1
        %s259 = scalar_lea.sflag [#allocation3], %s258
        %s260 = sand.u32 %s47, 1
        %s261 = smul.addr %s260, 32
        %s262 = scalar_lea.vmem [#allocation2], %s261
        // Predicated region
        $region33: #{tpu_custom_call.1} parent=31 // pred_check
          %p263 = pneg %p60
        $region34: #{tpu_custom_call.1} parent=31 // pred_check_branch
          %265 = sbr.rel (%p263) target = $region36
        $region35: #{tpu_custom_call.1} parent=31 // pred_region
          %267 = dma.done %s259, 512
        $region36: #{tpu_custom_call.1} parent=31 // pred_fallthru
          _
        %s268 = sand.u32 %s25, 1
        %s269 = scalar_lea.sflag [#allocation6], %s268
        %s270 = sand.u32 %s73, 1
        %s271 = smul.addr %s270, 3584
        %s272 = scalar_lea.vmem [#allocation5], %s271
        // Predicated region
        $region37: #{tpu_custom_call.1} parent=31 // pred_check
          %p273 = pneg %p86
        $region38: #{tpu_custom_call.1} parent=31 // pred_check_branch
          %275 = sbr.rel (%p273) target = $region40
        $region39: #{tpu_custom_call.1} parent=31 // pred_region
          %277 = dma.done %s269, 57344
        $region40: #{tpu_custom_call.1} parent=31 // pred_fallthru
          _
        // Predicated region
        $region41: #{tpu_custom_call.1} parent=31 // pred_check
          %p278 = pneg %p107
        $region42: #{tpu_custom_call.1} parent=31 // pred_check_branch
          %280 = sbr.rel (%p278) target = $region44
        $region43: #{tpu_custom_call.1} parent=31 // pred_region
          %282 = dma.done [#allocation6], 112
        $region44: #{tpu_custom_call.1} parent=31 // pred_fallthru
          _
        %s283 = sand.u32 %s47, 1
        %s284 = scalar_lea.sflag [#allocation3], %s283
        %s285 = sand.u32 %s47, 1
        %s286 = smul.addr %s285, 32
        %s287 = scalar_lea.vmem [#allocation2], %s286
        %p288 = pneg %p60
        %p289 = pneg %p57
        %s290 = sand.u32 %s25, 1
        %s291 = scalar_lea.sflag [#allocation6], %s290
        %s292 = sand.u32 %s73, 1
        %s293 = smul.addr %s292, 3584
        %s294 = scalar_lea.vmem [#allocation5], %s293
        %p295 = pneg %p86
        %p296 = pneg %p83
        %p297 = pneg %p107
        %p298 = pneg %p104
        %p299 = pneg %p133
        %p300 = pneg %p130
        %p301 = pneg %p154
        %p302 = pneg %p151
        %p303 = pneg %p175
        %p304 = pneg %p172
        %s305 = smul.u32 4, %s30
        %s306 = smul.u32 64, %s30
        %p307 = scmp.eq.s32.totalorder %s29, 0
        %p308 = scmp.eq.s32.totalorder %s30, 0
        %p309 = pnand %p307, %p308
        %p310 = pneg %p309
        // Predicated region
        $region45: #{tpu_custom_call.1} parent=31 // pred_check
          _
        $region46: #{tpu_custom_call.1} parent=31 // pred_check_branch
          %312 = sbr.rel (%p309) target = $region48
        $region47: #{tpu_custom_call.1} parent=31 // pred_region
          %v313 = vlaneseq
          %vm314 = vcmp.ge.s32.totalorder %v313, 0
          %vm315 = vcmp.lt.s32.totalorder %v313, 896
          %vm316 = vmand %vm314, %vm315
          %317 = vst.msk [vmem:[#allocation9] sm:$0x7f] %vm316, 0.0
          %318 = vst.msk [vmem:[#allocation11] sm:$0x7f] %vm316, 0.0
        $region48: #{tpu_custom_call.1} parent=31 // pred_fallthru
          _
        // Predicated region
        $region49: #{tpu_custom_call.1} parent=31 // pred_check
          %p319 = pneg %p308
        $region50: #{tpu_custom_call.1} parent=31 // pred_check_branch
          %321 = sbr.rel (%p319) target = $region52
        $region51: #{tpu_custom_call.1} parent=31 // pred_region
          %322 = vst [vmem:[#allocation8] sm:$0xff] 0.0
          %323 = vst [vmem:[#allocation8 + $0x8] sm:$0xff] 0.0
          %324 = vst [vmem:[#allocation8 + $0x10] sm:$0xff] 0.0
          %325 = vst [vmem:[#allocation8 + $0x18] sm:$0xff] 0.0
          %326 = vst [vmem:[#allocation8 + $0x20] sm:$0xff] 0.0
          %327 = vst [vmem:[#allocation8 + $0x28] sm:$0xff] 0.0
          %328 = vst [vmem:[#allocation8 + $0x30] sm:$0xff] 0.0
        $region52: #{tpu_custom_call.1} parent=31 // pred_fallthru
          _
        %v329 = vld [vmem:[#allocation8] sm:$0xff]
        %v330 = vld [vmem:[#allocation8 + $0x8] sm:$0xff]
        %v331 = vld [vmem:[#allocation8 + $0x10] sm:$0xff]
        %v332 = vld [vmem:[#allocation8 + $0x18] sm:$0xff]
        %v333 = vld [vmem:[#allocation8 + $0x20] sm:$0xff]
        %v334 = vld [vmem:[#allocation8 + $0x28] sm:$0xff]
        %v335 = vld [vmem:[#allocation8 + $0x30] sm:$0xff]
        %v336 = vld [vmem:[%s262] sm:$0xff]
        %v337 = vld [vmem:[%s262 + $0x8] sm:$0xff]
        %v338 = vld [vmem:[%s262 + $0x10] sm:$0xff]
        %v339 = vld [vmem:[%s262 + $0x18] sm:$0xff]
        %v340 = vld [vmem:[%s272] sm:$0xff]
        %v341 = vld [vmem:[%s272 + $0x8] sm:$0xff]
        %v342 = vld [vmem:[%s272 + $0x10] sm:$0xff]
        %v343 = vld [vmem:[%s272 + $0x18] sm:$0xff]
        %v344 = vld [vmem:[%s272 + $0x20] sm:$0xff]
        %v345 = vld [vmem:[%s272 + $0x28] sm:$0xff]
        %v346 = vld [vmem:[%s272 + $0x30] sm:$0xff]
        %v347 = vld [vmem:[%s272 + $0x38] sm:$0xff]
        %v348 = vld [vmem:[%s272 + $0x40] sm:$0xff]
        %v349 = vld [vmem:[%s272 + $0x48] sm:$0xff]
        %v350 = vld [vmem:[%s272 + $0x50] sm:$0xff]
        %v351 = vld [vmem:[%s272 + $0x58] sm:$0xff]
        %v352 = vld [vmem:[%s272 + $0x60] sm:$0xff]
        %v353 = vld [vmem:[%s272 + $0x68] sm:$0xff]
        %v354 = vld [vmem:[%s272 + $0x70] sm:$0xff]
        %v355 = vld [vmem:[%s272 + $0x78] sm:$0xff]
        %v356 = vld [vmem:[%s272 + $0x80] sm:$0xff]
        %v357 = vld [vmem:[%s272 + $0x88] sm:$0xff]
        %v358 = vld [vmem:[%s272 + $0x90] sm:$0xff]
        %v359 = vld [vmem:[%s272 + $0x98] sm:$0xff]
        %v360 = vld [vmem:[%s272 + $0xa0] sm:$0xff]
        %v361 = vld [vmem:[%s272 + $0xa8] sm:$0xff]
        %v362 = vld [vmem:[%s272 + $0xb0] sm:$0xff]
        %v363 = vld [vmem:[%s272 + $0xb8] sm:$0xff]
        %v364 = vld [vmem:[%s272 + $0xc0] sm:$0xff]
        %v365 = vld [vmem:[%s272 + $0xc8] sm:$0xff]
        %v366 = vld [vmem:[%s272 + $0xd0] sm:$0xff]
        %v367 = vld [vmem:[%s272 + $0xd8] sm:$0xff]
        %v368 = vld [vmem:[%s272 + $0xe0] sm:$0xff]
        %v369 = vld [vmem:[%s272 + $0xe8] sm:$0xff]
        %v370 = vld [vmem:[%s272 + $0xf0] sm:$0xff]
        %v371 = vld [vmem:[%s272 + $0xf8] sm:$0xff]
        %v372 = vld [vmem:[%s272 + $0x100] sm:$0xff]
        %v373 = vld [vmem:[%s272 + $0x108] sm:$0xff]
        %v374 = vld [vmem:[%s272 + $0x110] sm:$0xff]
        %v375 = vld [vmem:[%s272 + $0x118] sm:$0xff]
        %v376 = vld [vmem:[%s272 + $0x120] sm:$0xff]
        %v377 = vld [vmem:[%s272 + $0x128] sm:$0xff]
        %v378 = vld [vmem:[%s272 + $0x130] sm:$0xff]
        %v379 = vld [vmem:[%s272 + $0x138] sm:$0xff]
        %v380 = vld [vmem:[%s272 + $0x140] sm:$0xff]
        %v381 = vld [vmem:[%s272 + $0x148] sm:$0xff]
        %v382 = vld [vmem:[%s272 + $0x150] sm:$0xff]
        %v383 = vld [vmem:[%s272 + $0x158] sm:$0xff]
        %v384 = vld [vmem:[%s272 + $0x160] sm:$0xff]
        %v385 = vld [vmem:[%s272 + $0x168] sm:$0xff]
        %v386 = vld [vmem:[%s272 + $0x170] sm:$0xff]
        %v387 = vld [vmem:[%s272 + $0x178] sm:$0xff]
        %v388 = vld [vmem:[%s272 + $0x180] sm:$0xff]
        %v389 = vld [vmem:[%s272 + $0x188] sm:$0xff]
        %v390 = vld [vmem:[%s272 + $0x190] sm:$0xff]
        %v391 = vld [vmem:[%s272 + $0x198] sm:$0xff]
        %v392 = vld [vmem:[%s272 + $0x1a0] sm:$0xff]
        %v393 = vld [vmem:[%s272 + $0x1a8] sm:$0xff]
        %v394 = vld [vmem:[%s272 + $0x1b0] sm:$0xff]
        %v395 = vld [vmem:[%s272 + $0x1b8] sm:$0xff]
        %v396 = vld [vmem:[%s272 + $0x1c0] sm:$0xff]
        %v397 = vld [vmem:[%s272 + $0x1c8] sm:$0xff]
        %v398 = vld [vmem:[%s272 + $0x1d0] sm:$0xff]
        %v399 = vld [vmem:[%s272 + $0x1d8] sm:$0xff]
        %v400 = vld [vmem:[%s272 + $0x1e0] sm:$0xff]
        %v401 = vld [vmem:[%s272 + $0x1e8] sm:$0xff]
        %v402 = vld [vmem:[%s272 + $0x1f0] sm:$0xff]
        %v403 = vld [vmem:[%s272 + $0x1f8] sm:$0xff]
        %v404 = vld [vmem:[%s272 + $0x200] sm:$0xff]
        %v405 = vld [vmem:[%s272 + $0x208] sm:$0xff]
        %v406 = vld [vmem:[%s272 + $0x210] sm:$0xff]
        %v407 = vld [vmem:[%s272 + $0x218] sm:$0xff]
        %v408 = vld [vmem:[%s272 + $0x220] sm:$0xff]
        %v409 = vld [vmem:[%s272 + $0x228] sm:$0xff]
        %v410 = vld [vmem:[%s272 + $0x230] sm:$0xff]
        %v411 = vld [vmem:[%s272 + $0x238] sm:$0xff]
        %v412 = vld [vmem:[%s272 + $0x240] sm:$0xff]
        %v413 = vld [vmem:[%s272 + $0x248] sm:$0xff]
        %v414 = vld [vmem:[%s272 + $0x250] sm:$0xff]
        %v415 = vld [vmem:[%s272 + $0x258] sm:$0xff]
        %v416 = vld [vmem:[%s272 + $0x260] sm:$0xff]
        %v417 = vld [vmem:[%s272 + $0x268] sm:$0xff]
        %v418 = vld [vmem:[%s272 + $0x270] sm:$0xff]
        %v419 = vld [vmem:[%s272 + $0x278] sm:$0xff]
        %v420 = vld [vmem:[%s272 + $0x280] sm:$0xff]
        %v421 = vld [vmem:[%s272 + $0x288] sm:$0xff]
        %v422 = vld [vmem:[%s272 + $0x290] sm:$0xff]
        %v423 = vld [vmem:[%s272 + $0x298] sm:$0xff]
        %v424 = vld [vmem:[%s272 + $0x2a0] sm:$0xff]
        %v425 = vld [vmem:[%s272 + $0x2a8] sm:$0xff]
        %v426 = vld [vmem:[%s272 + $0x2b0] sm:$0xff]
        %v427 = vld [vmem:[%s272 + $0x2b8] sm:$0xff]
        %v428 = vld [vmem:[%s272 + $0x2c0] sm:$0xff]
        %v429 = vld [vmem:[%s272 + $0x2c8] sm:$0xff]
        %v430 = vld [vmem:[%s272 + $0x2d0] sm:$0xff]
        %v431 = vld [vmem:[%s272 + $0x2d8] sm:$0xff]
        %v432 = vld [vmem:[%s272 + $0x2e0] sm:$0xff]
        %v433 = vld [vmem:[%s272 + $0x2e8] sm:$0xff]
        %v434 = vld [vmem:[%s272 + $0x2f0] sm:$0xff]
        %v435 = vld [vmem:[%s272 + $0x2f8] sm:$0xff]
        %v436 = vld [vmem:[%s272 + $0x300] sm:$0xff]
        %v437 = vld [vmem:[%s272 + $0x308] sm:$0xff]
        %v438 = vld [vmem:[%s272 + $0x310] sm:$0xff]
        %v439 = vld [vmem:[%s272 + $0x318] sm:$0xff]
        %v440 = vld [vmem:[%s272 + $0x320] sm:$0xff]
        %v441 = vld [vmem:[%s272 + $0x328] sm:$0xff]
        %v442 = vld [vmem:[%s272 + $0x330] sm:$0xff]
        %v443 = vld [vmem:[%s272 + $0x338] sm:$0xff]
        %v444 = vld [vmem:[%s272 + $0x340] sm:$0xff]
        %v445 = vld [vmem:[%s272 + $0x348] sm:$0xff]
        %v446 = vld [vmem:[%s272 + $0x350] sm:$0xff]
        %v447 = vld [vmem:[%s272 + $0x358] sm:$0xff]
        %v448 = vld [vmem:[%s272 + $0x360] sm:$0xff]
        %v449 = vld [vmem:[%s272 + $0x368] sm:$0xff]
        %v450 = vld [vmem:[%s272 + $0x370] sm:$0xff]
        %v451 = vld [vmem:[%s272 + $0x378] sm:$0xff]
        %v452 = vld [vmem:[%s272 + $0x380] sm:$0xff]
        %v453 = vld [vmem:[%s272 + $0x388] sm:$0xff]
        %v454 = vld [vmem:[%s272 + $0x390] sm:$0xff]
        %v455 = vld [vmem:[%s272 + $0x398] sm:$0xff]
        %v456 = vld [vmem:[%s272 + $0x3a0] sm:$0xff]
        %v457 = vld [vmem:[%s272 + $0x3a8] sm:$0xff]
        %v458 = vld [vmem:[%s272 + $0x3b0] sm:$0xff]
        %v459 = vld [vmem:[%s272 + $0x3b8] sm:$0xff]
        %v460 = vld [vmem:[%s272 + $0x3c0] sm:$0xff]
        %v461 = vld [vmem:[%s272 + $0x3c8] sm:$0xff]
        %v462 = vld [vmem:[%s272 + $0x3d0] sm:$0xff]
        %v463 = vld [vmem:[%s272 + $0x3d8] sm:$0xff]
        %v464 = vld [vmem:[%s272 + $0x3e0] sm:$0xff]
        %v465 = vld [vmem:[%s272 + $0x3e8] sm:$0xff]
        %v466 = vld [vmem:[%s272 + $0x3f0] sm:$0xff]
        %v467 = vld [vmem:[%s272 + $0x3f8] sm:$0xff]
        %v468 = vld [vmem:[%s272 + $0x400] sm:$0xff]
        %v469 = vld [vmem:[%s272 + $0x408] sm:$0xff]
        %v470 = vld [vmem:[%s272 + $0x410] sm:$0xff]
        %v471 = vld [vmem:[%s272 + $0x418] sm:$0xff]
        %v472 = vld [vmem:[%s272 + $0x420] sm:$0xff]
        %v473 = vld [vmem:[%s272 + $0x428] sm:$0xff]
        %v474 = vld [vmem:[%s272 + $0x430] sm:$0xff]
        %v475 = vld [vmem:[%s272 + $0x438] sm:$0xff]
        %v476 = vld [vmem:[%s272 + $0x440] sm:$0xff]
        %v477 = vld [vmem:[%s272 + $0x448] sm:$0xff]
        %v478 = vld [vmem:[%s272 + $0x450] sm:$0xff]
        %v479 = vld [vmem:[%s272 + $0x458] sm:$0xff]
        %v480 = vld [vmem:[%s272 + $0x460] sm:$0xff]
        %v481 = vld [vmem:[%s272 + $0x468] sm:$0xff]
        %v482 = vld [vmem:[%s272 + $0x470] sm:$0xff]
        %v483 = vld [vmem:[%s272 + $0x478] sm:$0xff]
        %v484 = vld [vmem:[%s272 + $0x480] sm:$0xff]
        %v485 = vld [vmem:[%s272 + $0x488] sm:$0xff]
        %v486 = vld [vmem:[%s272 + $0x490] sm:$0xff]
        %v487 = vld [vmem:[%s272 + $0x498] sm:$0xff]
        %v488 = vld [vmem:[%s272 + $0x4a0] sm:$0xff]
        %v489 = vld [vmem:[%s272 + $0x4a8] sm:$0xff]
        %v490 = vld [vmem:[%s272 + $0x4b0] sm:$0xff]
        %v491 = vld [vmem:[%s272 + $0x4b8] sm:$0xff]
        %v492 = vld [vmem:[%s272 + $0x4c0] sm:$0xff]
        %v493 = vld [vmem:[%s272 + $0x4c8] sm:$0xff]
        %v494 = vld [vmem:[%s272 + $0x4d0] sm:$0xff]
        %v495 = vld [vmem:[%s272 + $0x4d8] sm:$0xff]
        %v496 = vld [vmem:[%s272 + $0x4e0] sm:$0xff]
        %v497 = vld [vmem:[%s272 + $0x4e8] sm:$0xff]
        %v498 = vld [vmem:[%s272 + $0x4f0] sm:$0xff]
        %v499 = vld [vmem:[%s272 + $0x4f8] sm:$0xff]
        %v500 = vld [vmem:[%s272 + $0x500] sm:$0xff]
        %v501 = vld [vmem:[%s272 + $0x508] sm:$0xff]
        %v502 = vld [vmem:[%s272 + $0x510] sm:$0xff]
        %v503 = vld [vmem:[%s272 + $0x518] sm:$0xff]
        %v504 = vld [vmem:[%s272 + $0x520] sm:$0xff]
        %v505 = vld [vmem:[%s272 + $0x528] sm:$0xff]
        %v506 = vld [vmem:[%s272 + $0x530] sm:$0xff]
        %v507 = vld [vmem:[%s272 + $0x538] sm:$0xff]
        %v508 = vld [vmem:[%s272 + $0x540] sm:$0xff]
        %v509 = vld [vmem:[%s272 + $0x548] sm:$0xff]
        %v510 = vld [vmem:[%s272 + $0x550] sm:$0xff]
        %v511 = vld [vmem:[%s272 + $0x558] sm:$0xff]
        %v512 = vld [vmem:[%s272 + $0x560] sm:$0xff]
        %v513 = vld [vmem:[%s272 + $0x568] sm:$0xff]
        %v514 = vld [vmem:[%s272 + $0x570] sm:$0xff]
        %v515 = vld [vmem:[%s272 + $0x578] sm:$0xff]
        %v516 = vld [vmem:[%s272 + $0x580] sm:$0xff]
        %v517 = vld [vmem:[%s272 + $0x588] sm:$0xff]
        %v518 = vld [vmem:[%s272 + $0x590] sm:$0xff]
        %v519 = vld [vmem:[%s272 + $0x598] sm:$0xff]
        %v520 = vld [vmem:[%s272 + $0x5a0] sm:$0xff]
        %v521 = vld [vmem:[%s272 + $0x5a8] sm:$0xff]
        %v522 = vld [vmem:[%s272 + $0x5b0] sm:$0xff]
        %v523 = vld [vmem:[%s272 + $0x5b8] sm:$0xff]
        %v524 = vld [vmem:[%s272 + $0x5c0] sm:$0xff]
        %v525 = vld [vmem:[%s272 + $0x5c8] sm:$0xff]
        %v526 = vld [vmem:[%s272 + $0x5d0] sm:$0xff]
        %v527 = vld [vmem:[%s272 + $0x5d8] sm:$0xff]
        %v528 = vld [vmem:[%s272 + $0x5e0] sm:$0xff]
        %v529 = vld [vmem:[%s272 + $0x5e8] sm:$0xff]
        %v530 = vld [vmem:[%s272 + $0x5f0] sm:$0xff]
        %v531 = vld [vmem:[%s272 + $0x5f8] sm:$0xff]
        %v532 = vld [vmem:[%s272 + $0x600] sm:$0xff]
        %v533 = vld [vmem:[%s272 + $0x608] sm:$0xff]
        %v534 = vld [vmem:[%s272 + $0x610] sm:$0xff]
        %v535 = vld [vmem:[%s272 + $0x618] sm:$0xff]
        %v536 = vld [vmem:[%s272 + $0x620] sm:$0xff]
        %v537 = vld [vmem:[%s272 + $0x628] sm:$0xff]
        %v538 = vld [vmem:[%s272 + $0x630] sm:$0xff]
        %v539 = vld [vmem:[%s272 + $0x638] sm:$0xff]
        %v540 = vld [vmem:[%s272 + $0x640] sm:$0xff]
        %v541 = vld [vmem:[%s272 + $0x648] sm:$0xff]
        %v542 = vld [vmem:[%s272 + $0x650] sm:$0xff]
        %v543 = vld [vmem:[%s272 + $0x658] sm:$0xff]
        %v544 = vld [vmem:[%s272 + $0x660] sm:$0xff]
        %v545 = vld [vmem:[%s272 + $0x668] sm:$0xff]
        %v546 = vld [vmem:[%s272 + $0x670] sm:$0xff]
        %v547 = vld [vmem:[%s272 + $0x678] sm:$0xff]
        %v548 = vld [vmem:[%s272 + $0x680] sm:$0xff]
        %v549 = vld [vmem:[%s272 + $0x688] sm:$0xff]
        %v550 = vld [vmem:[%s272 + $0x690] sm:$0xff]
        %v551 = vld [vmem:[%s272 + $0x698] sm:$0xff]
        %v552 = vld [vmem:[%s272 + $0x6a0] sm:$0xff]
        %v553 = vld [vmem:[%s272 + $0x6a8] sm:$0xff]
        %v554 = vld [vmem:[%s272 + $0x6b0] sm:$0xff]
        %v555 = vld [vmem:[%s272 + $0x6b8] sm:$0xff]
        %v556 = vld [vmem:[%s272 + $0x6c0] sm:$0xff]
        %v557 = vld [vmem:[%s272 + $0x6c8] sm:$0xff]
        %v558 = vld [vmem:[%s272 + $0x6d0] sm:$0xff]
        %v559 = vld [vmem:[%s272 + $0x6d8] sm:$0xff]
        %v560 = vld [vmem:[%s272 + $0x6e0] sm:$0xff]
        %v561 = vld [vmem:[%s272 + $0x6e8] sm:$0xff]
        %v562 = vld [vmem:[%s272 + $0x6f0] sm:$0xff]
        %v563 = vld [vmem:[%s272 + $0x6f8] sm:$0xff]
        %v564 = vld [vmem:[%s272 + $0x700] sm:$0xff]
        %v565 = vld [vmem:[%s272 + $0x708] sm:$0xff]
        %v566 = vld [vmem:[%s272 + $0x710] sm:$0xff]
        %v567 = vld [vmem:[%s272 + $0x718] sm:$0xff]
        %v568 = vld [vmem:[%s272 + $0x720] sm:$0xff]
        %v569 = vld [vmem:[%s272 + $0x728] sm:$0xff]
        %v570 = vld [vmem:[%s272 + $0x730] sm:$0xff]
        %v571 = vld [vmem:[%s272 + $0x738] sm:$0xff]
        %v572 = vld [vmem:[%s272 + $0x740] sm:$0xff]
        %v573 = vld [vmem:[%s272 + $0x748] sm:$0xff]
        %v574 = vld [vmem:[%s272 + $0x750] sm:$0xff]
        %v575 = vld [vmem:[%s272 + $0x758] sm:$0xff]
        %v576 = vld [vmem:[%s272 + $0x760] sm:$0xff]
        %v577 = vld [vmem:[%s272 + $0x768] sm:$0xff]
        %v578 = vld [vmem:[%s272 + $0x770] sm:$0xff]
        %v579 = vld [vmem:[%s272 + $0x778] sm:$0xff]
        %v580 = vld [vmem:[%s272 + $0x780] sm:$0xff]
        %v581 = vld [vmem:[%s272 + $0x788] sm:$0xff]
        %v582 = vld [vmem:[%s272 + $0x790] sm:$0xff]
        %v583 = vld [vmem:[%s272 + $0x798] sm:$0xff]
        %v584 = vld [vmem:[%s272 + $0x7a0] sm:$0xff]
        %v585 = vld [vmem:[%s272 + $0x7a8] sm:$0xff]
        %v586 = vld [vmem:[%s272 + $0x7b0] sm:$0xff]
        %v587 = vld [vmem:[%s272 + $0x7b8] sm:$0xff]
        %v588 = vld [vmem:[%s272 + $0x7c0] sm:$0xff]
        %v589 = vld [vmem:[%s272 + $0x7c8] sm:$0xff]
        %v590 = vld [vmem:[%s272 + $0x7d0] sm:$0xff]
        %v591 = vld [vmem:[%s272 + $0x7d8] sm:$0xff]
        %v592 = vld [vmem:[%s272 + $0x7e0] sm:$0xff]
        %v593 = vld [vmem:[%s272 + $0x7e8] sm:$0xff]
        %v594 = vld [vmem:[%s272 + $0x7f0] sm:$0xff]
        %v595 = vld [vmem:[%s272 + $0x7f8] sm:$0xff]
        %v596 = vld [vmem:[%s272 + $0x800] sm:$0xff]
        %v597 = vld [vmem:[%s272 + $0x808] sm:$0xff]
        %v598 = vld [vmem:[%s272 + $0x810] sm:$0xff]
        %v599 = vld [vmem:[%s272 + $0x818] sm:$0xff]
        %v600 = vld [vmem:[%s272 + $0x820] sm:$0xff]
        %v601 = vld [vmem:[%s272 + $0x828] sm:$0xff]
        %v602 = vld [vmem:[%s272 + $0x830] sm:$0xff]
        %v603 = vld [vmem:[%s272 + $0x838] sm:$0xff]
        %v604 = vld [vmem:[%s272 + $0x840] sm:$0xff]
        %v605 = vld [vmem:[%s272 + $0x848] sm:$0xff]
        %v606 = vld [vmem:[%s272 + $0x850] sm:$0xff]
        %v607 = vld [vmem:[%s272 + $0x858] sm:$0xff]
        %v608 = vld [vmem:[%s272 + $0x860] sm:$0xff]
        %v609 = vld [vmem:[%s272 + $0x868] sm:$0xff]
        %v610 = vld [vmem:[%s272 + $0x870] sm:$0xff]
        %v611 = vld [vmem:[%s272 + $0x878] sm:$0xff]
        %v612 = vld [vmem:[%s272 + $0x880] sm:$0xff]
        %v613 = vld [vmem:[%s272 + $0x888] sm:$0xff]
        %v614 = vld [vmem:[%s272 + $0x890] sm:$0xff]
        %v615 = vld [vmem:[%s272 + $0x898] sm:$0xff]
        %v616 = vld [vmem:[%s272 + $0x8a0] sm:$0xff]
        %v617 = vld [vmem:[%s272 + $0x8a8] sm:$0xff]
        %v618 = vld [vmem:[%s272 + $0x8b0] sm:$0xff]
        %v619 = vld [vmem:[%s272 + $0x8b8] sm:$0xff]
        %v620 = vld [vmem:[%s272 + $0x8c0] sm:$0xff]
        %v621 = vld [vmem:[%s272 + $0x8c8] sm:$0xff]
        %v622 = vld [vmem:[%s272 + $0x8d0] sm:$0xff]
        %v623 = vld [vmem:[%s272 + $0x8d8] sm:$0xff]
        %v624 = vld [vmem:[%s272 + $0x8e0] sm:$0xff]
        %v625 = vld [vmem:[%s272 + $0x8e8] sm:$0xff]
        %v626 = vld [vmem:[%s272 + $0x8f0] sm:$0xff]
        %v627 = vld [vmem:[%s272 + $0x8f8] sm:$0xff]
        %v628 = vld [vmem:[%s272 + $0x900] sm:$0xff]
        %v629 = vld [vmem:[%s272 + $0x908] sm:$0xff]
        %v630 = vld [vmem:[%s272 + $0x910] sm:$0xff]
        %v631 = vld [vmem:[%s272 + $0x918] sm:$0xff]
        %v632 = vld [vmem:[%s272 + $0x920] sm:$0xff]
        %v633 = vld [vmem:[%s272 + $0x928] sm:$0xff]
        %v634 = vld [vmem:[%s272 + $0x930] sm:$0xff]
        %v635 = vld [vmem:[%s272 + $0x938] sm:$0xff]
        %v636 = vld [vmem:[%s272 + $0x940] sm:$0xff]
        %v637 = vld [vmem:[%s272 + $0x948] sm:$0xff]
        %v638 = vld [vmem:[%s272 + $0x950] sm:$0xff]
        %v639 = vld [vmem:[%s272 + $0x958] sm:$0xff]
        %v640 = vld [vmem:[%s272 + $0x960] sm:$0xff]
        %v641 = vld [vmem:[%s272 + $0x968] sm:$0xff]
        %v642 = vld [vmem:[%s272 + $0x970] sm:$0xff]
        %v643 = vld [vmem:[%s272 + $0x978] sm:$0xff]
        %v644 = vld [vmem:[%s272 + $0x980] sm:$0xff]
        %v645 = vld [vmem:[%s272 + $0x988] sm:$0xff]
        %v646 = vld [vmem:[%s272 + $0x990] sm:$0xff]
        %v647 = vld [vmem:[%s272 + $0x998] sm:$0xff]
        %v648 = vld [vmem:[%s272 + $0x9a0] sm:$0xff]
        %v649 = vld [vmem:[%s272 + $0x9a8] sm:$0xff]
        %v650 = vld [vmem:[%s272 + $0x9b0] sm:$0xff]
        %v651 = vld [vmem:[%s272 + $0x9b8] sm:$0xff]
        %v652 = vld [vmem:[%s272 + $0x9c0] sm:$0xff]
        %v653 = vld [vmem:[%s272 + $0x9c8] sm:$0xff]
        %v654 = vld [vmem:[%s272 + $0x9d0] sm:$0xff]
        %v655 = vld [vmem:[%s272 + $0x9d8] sm:$0xff]
        %v656 = vld [vmem:[%s272 + $0x9e0] sm:$0xff]
        %v657 = vld [vmem:[%s272 + $0x9e8] sm:$0xff]
        %v658 = vld [vmem:[%s272 + $0x9f0] sm:$0xff]
        %v659 = vld [vmem:[%s272 + $0x9f8] sm:$0xff]
        %v660 = vld [vmem:[%s272 + $0xa00] sm:$0xff]
        %v661 = vld [vmem:[%s272 + $0xa08] sm:$0xff]
        %v662 = vld [vmem:[%s272 + $0xa10] sm:$0xff]
        %v663 = vld [vmem:[%s272 + $0xa18] sm:$0xff]
        %v664 = vld [vmem:[%s272 + $0xa20] sm:$0xff]
        %v665 = vld [vmem:[%s272 + $0xa28] sm:$0xff]
        %v666 = vld [vmem:[%s272 + $0xa30] sm:$0xff]
        %v667 = vld [vmem:[%s272 + $0xa38] sm:$0xff]
        %v668 = vld [vmem:[%s272 + $0xa40] sm:$0xff]
        %v669 = vld [vmem:[%s272 + $0xa48] sm:$0xff]
        %v670 = vld [vmem:[%s272 + $0xa50] sm:$0xff]
        %v671 = vld [vmem:[%s272 + $0xa58] sm:$0xff]
        %v672 = vld [vmem:[%s272 + $0xa60] sm:$0xff]
        %v673 = vld [vmem:[%s272 + $0xa68] sm:$0xff]
        %v674 = vld [vmem:[%s272 + $0xa70] sm:$0xff]
        %v675 = vld [vmem:[%s272 + $0xa78] sm:$0xff]
        %v676 = vld [vmem:[%s272 + $0xa80] sm:$0xff]
        %v677 = vld [vmem:[%s272 + $0xa88] sm:$0xff]
        %v678 = vld [vmem:[%s272 + $0xa90] sm:$0xff]
        %v679 = vld [vmem:[%s272 + $0xa98] sm:$0xff]
        %v680 = vld [vmem:[%s272 + $0xaa0] sm:$0xff]
        %v681 = vld [vmem:[%s272 + $0xaa8] sm:$0xff]
        %v682 = vld [vmem:[%s272 + $0xab0] sm:$0xff]
        %v683 = vld [vmem:[%s272 + $0xab8] sm:$0xff]
        %v684 = vld [vmem:[%s272 + $0xac0] sm:$0xff]
        %v685 = vld [vmem:[%s272 + $0xac8] sm:$0xff]
        %v686 = vld [vmem:[%s272 + $0xad0] sm:$0xff]
        %v687 = vld [vmem:[%s272 + $0xad8] sm:$0xff]
        %v688 = vld [vmem:[%s272 + $0xae0] sm:$0xff]
        %v689 = vld [vmem:[%s272 + $0xae8] sm:$0xff]
        %v690 = vld [vmem:[%s272 + $0xaf0] sm:$0xff]
        %v691 = vld [vmem:[%s272 + $0xaf8] sm:$0xff]
        %v692 = vld [vmem:[%s272 + $0xb00] sm:$0xff]
        %v693 = vld [vmem:[%s272 + $0xb08] sm:$0xff]
        %v694 = vld [vmem:[%s272 + $0xb10] sm:$0xff]
        %v695 = vld [vmem:[%s272 + $0xb18] sm:$0xff]
        %v696 = vld [vmem:[%s272 + $0xb20] sm:$0xff]
        %v697 = vld [vmem:[%s272 + $0xb28] sm:$0xff]
        %v698 = vld [vmem:[%s272 + $0xb30] sm:$0xff]
        %v699 = vld [vmem:[%s272 + $0xb38] sm:$0xff]
        %v700 = vld [vmem:[%s272 + $0xb40] sm:$0xff]
        %v701 = vld [vmem:[%s272 + $0xb48] sm:$0xff]
        %v702 = vld [vmem:[%s272 + $0xb50] sm:$0xff]
        %v703 = vld [vmem:[%s272 + $0xb58] sm:$0xff]
        %v704 = vld [vmem:[%s272 + $0xb60] sm:$0xff]
        %v705 = vld [vmem:[%s272 + $0xb68] sm:$0xff]
        %v706 = vld [vmem:[%s272 + $0xb70] sm:$0xff]
        %v707 = vld [vmem:[%s272 + $0xb78] sm:$0xff]
        %v708 = vld [vmem:[%s272 + $0xb80] sm:$0xff]
        %v709 = vld [vmem:[%s272 + $0xb88] sm:$0xff]
        %v710 = vld [vmem:[%s272 + $0xb90] sm:$0xff]
        %v711 = vld [vmem:[%s272 + $0xb98] sm:$0xff]
        %v712 = vld [vmem:[%s272 + $0xba0] sm:$0xff]
        %v713 = vld [vmem:[%s272 + $0xba8] sm:$0xff]
        %v714 = vld [vmem:[%s272 + $0xbb0] sm:$0xff]
        %v715 = vld [vmem:[%s272 + $0xbb8] sm:$0xff]
        %v716 = vld [vmem:[%s272 + $0xbc0] sm:$0xff]
        %v717 = vld [vmem:[%s272 + $0xbc8] sm:$0xff]
        %v718 = vld [vmem:[%s272 + $0xbd0] sm:$0xff]
        %v719 = vld [vmem:[%s272 + $0xbd8] sm:$0xff]
        %v720 = vld [vmem:[%s272 + $0xbe0] sm:$0xff]
        %v721 = vld [vmem:[%s272 + $0xbe8] sm:$0xff]
        %v722 = vld [vmem:[%s272 + $0xbf0] sm:$0xff]
        %v723 = vld [vmem:[%s272 + $0xbf8] sm:$0xff]
        %v724 = vld [vmem:[%s272 + $0xc00] sm:$0xff]
        %v725 = vld [vmem:[%s272 + $0xc08] sm:$0xff]
        %v726 = vld [vmem:[%s272 + $0xc10] sm:$0xff]
        %v727 = vld [vmem:[%s272 + $0xc18] sm:$0xff]
        %v728 = vld [vmem:[%s272 + $0xc20] sm:$0xff]
        %v729 = vld [vmem:[%s272 + $0xc28] sm:$0xff]
        %v730 = vld [vmem:[%s272 + $0xc30] sm:$0xff]
        %v731 = vld [vmem:[%s272 + $0xc38] sm:$0xff]
        %v732 = vld [vmem:[%s272 + $0xc40] sm:$0xff]
        %v733 = vld [vmem:[%s272 + $0xc48] sm:$0xff]
        %v734 = vld [vmem:[%s272 + $0xc50] sm:$0xff]
        %v735 = vld [vmem:[%s272 + $0xc58] sm:$0xff]
        %v736 = vld [vmem:[%s272 + $0xc60] sm:$0xff]
        %v737 = vld [vmem:[%s272 + $0xc68] sm:$0xff]
        %v738 = vld [vmem:[%s272 + $0xc70] sm:$0xff]
        %v739 = vld [vmem:[%s272 + $0xc78] sm:$0xff]
        %v740 = vld [vmem:[%s272 + $0xc80] sm:$0xff]
        %v741 = vld [vmem:[%s272 + $0xc88] sm:$0xff]
        %v742 = vld [vmem:[%s272 + $0xc90] sm:$0xff]
        %v743 = vld [vmem:[%s272 + $0xc98] sm:$0xff]
        %v744 = vld [vmem:[%s272 + $0xca0] sm:$0xff]
        %v745 = vld [vmem:[%s272 + $0xca8] sm:$0xff]
        %v746 = vld [vmem:[%s272 + $0xcb0] sm:$0xff]
        %v747 = vld [vmem:[%s272 + $0xcb8] sm:$0xff]
        %v748 = vld [vmem:[%s272 + $0xcc0] sm:$0xff]
        %v749 = vld [vmem:[%s272 + $0xcc8] sm:$0xff]
        %v750 = vld [vmem:[%s272 + $0xcd0] sm:$0xff]
        %v751 = vld [vmem:[%s272 + $0xcd8] sm:$0xff]
        %v752 = vld [vmem:[%s272 + $0xce0] sm:$0xff]
        %v753 = vld [vmem:[%s272 + $0xce8] sm:$0xff]
        %v754 = vld [vmem:[%s272 + $0xcf0] sm:$0xff]
        %v755 = vld [vmem:[%s272 + $0xcf8] sm:$0xff]
        %v756 = vld [vmem:[%s272 + $0xd00] sm:$0xff]
        %v757 = vld [vmem:[%s272 + $0xd08] sm:$0xff]
        %v758 = vld [vmem:[%s272 + $0xd10] sm:$0xff]
        %v759 = vld [vmem:[%s272 + $0xd18] sm:$0xff]
        %v760 = vld [vmem:[%s272 + $0xd20] sm:$0xff]
        %v761 = vld [vmem:[%s272 + $0xd28] sm:$0xff]
        %v762 = vld [vmem:[%s272 + $0xd30] sm:$0xff]
        %v763 = vld [vmem:[%s272 + $0xd38] sm:$0xff]
        %v764 = vld [vmem:[%s272 + $0xd40] sm:$0xff]
        %v765 = vld [vmem:[%s272 + $0xd48] sm:$0xff]
        %v766 = vld [vmem:[%s272 + $0xd50] sm:$0xff]
        %v767 = vld [vmem:[%s272 + $0xd58] sm:$0xff]
        %v768 = vld [vmem:[%s272 + $0xd60] sm:$0xff]
        %v769 = vld [vmem:[%s272 + $0xd68] sm:$0xff]
        %v770 = vld [vmem:[%s272 + $0xd70] sm:$0xff]
        %v771 = vld [vmem:[%s272 + $0xd78] sm:$0xff]
        %v772 = vld [vmem:[%s272 + $0xd80] sm:$0xff]
        %v773 = vld [vmem:[%s272 + $0xd88] sm:$0xff]
        %v774 = vld [vmem:[%s272 + $0xd90] sm:$0xff]
        %v775 = vld [vmem:[%s272 + $0xd98] sm:$0xff]
        %v776 = vld [vmem:[%s272 + $0xda0] sm:$0xff]
        %v777 = vld [vmem:[%s272 + $0xda8] sm:$0xff]
        %v778 = vld [vmem:[%s272 + $0xdb0] sm:$0xff]
        %v779 = vld [vmem:[%s272 + $0xdb8] sm:$0xff]
        %v780 = vld [vmem:[%s272 + $0xdc0] sm:$0xff]
        %v781 = vld [vmem:[%s272 + $0xdc8] sm:$0xff]
        %v782 = vld [vmem:[%s272 + $0xdd0] sm:$0xff]
        %v783 = vld [vmem:[%s272 + $0xdd8] sm:$0xff]
        %v784 = vld [vmem:[%s272 + $0xde0] sm:$0xff]
        %v785 = vld [vmem:[%s272 + $0xde8] sm:$0xff]
        %v786 = vld [vmem:[%s272 + $0xdf0] sm:$0xff]
        %v787 = vld [vmem:[%s272 + $0xdf8] sm:$0xff]
        %788 = vmatpush.msra.mxu0 %v445
        %789 = vmatpush.msra.mxu0 %v438
        %790 = vmatpush.msra.mxu0 %v431
        %791 = vmatpush.msra.mxu0 %v424
        %792 = vmatpush.msra.mxu0 %v417
        %793 = vmatpush.msra.mxu0 %v410
        %794 = vmatpush.msra.mxu0 %v403
        %795 = vmatpush.msra.mxu0 %v396
        %796 = vmatpush.msra.mxu0 %v389
        %797 = vmatpush.msra.mxu0 %v382
        %798 = vmatpush.msra.mxu0 %v375
        %799 = vmatpush.msra.mxu0 %v368
        %800 = vmatpush.msra.mxu0 %v361
        %801 = vmatpush.msra.mxu0 %v354
        %802 = vmatpush.msra.mxu0 %v347
        %803 = vmatpush.msra.mxu0 %v340
        %804 = vmatmul.f32.gmra.mxu0 %v336
        %v805 = vpop.f32.mrf.mxu0
        %v806 = vadd.f32 0.0, %v805
        %807 = vdwg.mxu0
        %808 = vmatpush.msra.mxu0 %v557
        %809 = vmatpush.msra.mxu0 %v550
        %810 = vmatpush.msra.mxu0 %v543
        %811 = vmatpush.msra.mxu0 %v536
        %812 = vmatpush.msra.mxu0 %v529
        %813 = vmatpush.msra.mxu0 %v522
        %814 = vmatpush.msra.mxu0 %v515
        %815 = vmatpush.msra.mxu0 %v508
        %816 = vmatpush.msra.mxu0 %v501
        %817 = vmatpush.msra.mxu0 %v494
        %818 = vmatpush.msra.mxu0 %v487
        %819 = vmatpush.msra.mxu0 %v480
        %820 = vmatpush.msra.mxu0 %v473
        %821 = vmatpush.msra.mxu0 %v466
        %822 = vmatpush.msra.mxu0 %v459
        %823 = vmatpush.msra.mxu0 %v452
        %824 = vmatmul.f32.gmra.mxu0 %v337
        %v825 = vpop.f32.mrf.mxu0
        %v826 = vadd.f32 %v806, %v825
        %827 = vdwg.mxu0
        %828 = vmatpush.msra.mxu0 %v669
        %829 = vmatpush.msra.mxu0 %v662
        %830 = vmatpush.msra.mxu0 %v655
        %831 = vmatpush.msra.mxu0 %v648
        %832 = vmatpush.msra.mxu0 %v641
        %833 = vmatpush.msra.mxu0 %v634
        %834 = vmatpush.msra.mxu0 %v627
        %835 = vmatpush.msra.mxu0 %v620
        %836 = vmatpush.msra.mxu0 %v613
        %837 = vmatpush.msra.mxu0 %v606
        %838 = vmatpush.msra.mxu0 %v599
        %839 = vmatpush.msra.mxu0 %v592
        %840 = vmatpush.msra.mxu0 %v585
        %841 = vmatpush.msra.mxu0 %v578
        %842 = vmatpush.msra.mxu0 %v571
        %843 = vmatpush.msra.mxu0 %v564
        %844 = vmatmul.f32.gmra.mxu0 %v338
        %v845 = vpop.f32.mrf.mxu0
        %v846 = vadd.f32 %v826, %v845
        %847 = vdwg.mxu0
        %848 = vmatpush.msra.mxu0 %v781
        %849 = vmatpush.msra.mxu0 %v774
        %850 = vmatpush.msra.mxu0 %v767
        %851 = vmatpush.msra.mxu0 %v760
        %852 = vmatpush.msra.mxu0 %v753
        %853 = vmatpush.msra.mxu0 %v746
        %854 = vmatpush.msra.mxu0 %v739
        %855 = vmatpush.msra.mxu0 %v732
        %856 = vmatpush.msra.mxu0 %v725
        %857 = vmatpush.msra.mxu0 %v718
        %858 = vmatpush.msra.mxu0 %v711
        %859 = vmatpush.msra.mxu0 %v704
        %860 = vmatpush.msra.mxu0 %v697
        %861 = vmatpush.msra.mxu0 %v690
        %862 = vmatpush.msra.mxu0 %v683
        %863 = vmatpush.msra.mxu0 %v676
        %864 = vmatmul.f32.gmra.mxu0 %v339
        %v865 = vpop.f32.mrf.mxu0
        %v866 = vadd.f32 %v846, %v865
        %867 = vdwg.mxu0
        %868 = vmatpush.msra.mxu0 %v446
        %869 = vmatpush.msra.mxu0 %v439
        %870 = vmatpush.msra.mxu0 %v432
        %871 = vmatpush.msra.mxu0 %v425
        %872 = vmatpush.msra.mxu0 %v418
        %873 = vmatpush.msra.mxu0 %v411
        %874 = vmatpush.msra.mxu0 %v404
        %875 = vmatpush.msra.mxu0 %v397
        %876 = vmatpush.msra.mxu0 %v390
        %877 = vmatpush.msra.mxu0 %v383
        %878 = vmatpush.msra.mxu0 %v376
        %879 = vmatpush.msra.mxu0 %v369
        %880 = vmatpush.msra.mxu0 %v362
        %881 = vmatpush.msra.mxu0 %v355
        %882 = vmatpush.msra.mxu0 %v348
        %883 = vmatpush.msra.mxu0 %v341
        %884 = vmatmul.f32.gmra.mxu0 %v336
        %v885 = vpop.f32.mrf.mxu0
        %v886 = vadd.f32 0.0, %v885
        %887 = vdwg.mxu0
        %888 = vmatpush.msra.mxu0 %v558
        %889 = vmatpush.msra.mxu0 %v551
        %890 = vmatpush.msra.mxu0 %v544
        %891 = vmatpush.msra.mxu0 %v537
        %892 = vmatpush.msra.mxu0 %v530
        %893 = vmatpush.msra.mxu0 %v523
        %894 = vmatpush.msra.mxu0 %v516
        %895 = vmatpush.msra.mxu0 %v509
        %896 = vmatpush.msra.mxu0 %v502
        %897 = vmatpush.msra.mxu0 %v495
        %898 = vmatpush.msra.mxu0 %v488
        %899 = vmatpush.msra.mxu0 %v481
        %900 = vmatpush.msra.mxu0 %v474
        %901 = vmatpush.msra.mxu0 %v467
        %902 = vmatpush.msra.mxu0 %v460
        %903 = vmatpush.msra.mxu0 %v453
        %904 = vmatmul.f32.gmra.mxu0 %v337
        %v905 = vpop.f32.mrf.mxu0
        %v906 = vadd.f32 %v886, %v905
        %907 = vdwg.mxu0
        %908 = vmatpush.msra.mxu0 %v670
        %909 = vmatpush.msra.mxu0 %v663
        %910 = vmatpush.msra.mxu0 %v656
        %911 = vmatpush.msra.mxu0 %v649
        %912 = vmatpush.msra.mxu0 %v642
        %913 = vmatpush.msra.mxu0 %v635
        %914 = vmatpush.msra.mxu0 %v628
        %915 = vmatpush.msra.mxu0 %v621
        %916 = vmatpush.msra.mxu0 %v614
        %917 = vmatpush.msra.mxu0 %v607
        %918 = vmatpush.msra.mxu0 %v600
        %919 = vmatpush.msra.mxu0 %v593
        %920 = vmatpush.msra.mxu0 %v586
        %921 = vmatpush.msra.mxu0 %v579
        %922 = vmatpush.msra.mxu0 %v572
        %923 = vmatpush.msra.mxu0 %v565
        %924 = vmatmul.f32.gmra.mxu0 %v338
        %v925 = vpop.f32.mrf.mxu0
        %v926 = vadd.f32 %v906, %v925
        %927 = vdwg.mxu0
        %928 = vmatpush.msra.mxu0 %v782
        %929 = vmatpush.msra.mxu0 %v775
        %930 = vmatpush.msra.mxu0 %v768
        %931 = vmatpush.msra.mxu0 %v761
        %932 = vmatpush.msra.mxu0 %v754
        %933 = vmatpush.msra.mxu0 %v747
        %934 = vmatpush.msra.mxu0 %v740
        %935 = vmatpush.msra.mxu0 %v733
        %936 = vmatpush.msra.mxu0 %v726
        %937 = vmatpush.msra.mxu0 %v719
        %938 = vmatpush.msra.mxu0 %v712
        %939 = vmatpush.msra.mxu0 %v705
        %940 = vmatpush.msra.mxu0 %v698
        %941 = vmatpush.msra.mxu0 %v691
        %942 = vmatpush.msra.mxu0 %v684
        %943 = vmatpush.msra.mxu0 %v677
        %944 = vmatmul.f32.gmra.mxu0 %v339
        %v945 = vpop.f32.mrf.mxu0
        %v946 = vadd.f32 %v926, %v945
        %947 = vdwg.mxu0
        %948 = vmatpush.msra.mxu0 %v447
        %949 = vmatpush.msra.mxu0 %v440
        %950 = vmatpush.msra.mxu0 %v433
        %951 = vmatpush.msra.mxu0 %v426
        %952 = vmatpush.msra.mxu0 %v419
        %953 = vmatpush.msra.mxu0 %v412
        %954 = vmatpush.msra.mxu0 %v405
        %955 = vmatpush.msra.mxu0 %v398
        %956 = vmatpush.msra.mxu0 %v391
        %957 = vmatpush.msra.mxu0 %v384
        %958 = vmatpush.msra.mxu0 %v377
        %959 = vmatpush.msra.mxu0 %v370
        %960 = vmatpush.msra.mxu0 %v363
        %961 = vmatpush.msra.mxu0 %v356
        %962 = vmatpush.msra.mxu0 %v349
        %963 = vmatpush.msra.mxu0 %v342
        %964 = vmatmul.f32.gmra.mxu0 %v336
        %v965 = vpop.f32.mrf.mxu0
        %v966 = vadd.f32 0.0, %v965
        %967 = vdwg.mxu0
        %968 = vmatpush.msra.mxu0 %v559
        %969 = vmatpush.msra.mxu0 %v552
        %970 = vmatpush.msra.mxu0 %v545
        %971 = vmatpush.msra.mxu0 %v538
        %972 = vmatpush.msra.mxu0 %v531
        %973 = vmatpush.msra.mxu0 %v524
        %974 = vmatpush.msra.mxu0 %v517
        %975 = vmatpush.msra.mxu0 %v510
        %976 = vmatpush.msra.mxu0 %v503
        %977 = vmatpush.msra.mxu0 %v496
        %978 = vmatpush.msra.mxu0 %v489
        %979 = vmatpush.msra.mxu0 %v482
        %980 = vmatpush.msra.mxu0 %v475
        %981 = vmatpush.msra.mxu0 %v468
        %982 = vmatpush.msra.mxu0 %v461
        %983 = vmatpush.msra.mxu0 %v454
        %984 = vmatmul.f32.gmra.mxu0 %v337
        %v985 = vpop.f32.mrf.mxu0
        %v986 = vadd.f32 %v966, %v985
        %987 = vdwg.mxu0
        %988 = vmatpush.msra.mxu0 %v671
        %989 = vmatpush.msra.mxu0 %v664
        %990 = vmatpush.msra.mxu0 %v657
        %991 = vmatpush.msra.mxu0 %v650
        %992 = vmatpush.msra.mxu0 %v643
        %993 = vmatpush.msra.mxu0 %v636
        %994 = vmatpush.msra.mxu0 %v629
        %995 = vmatpush.msra.mxu0 %v622
        %996 = vmatpush.msra.mxu0 %v615
        %997 = vmatpush.msra.mxu0 %v608
        %998 = vmatpush.msra.mxu0 %v601
        %999 = vmatpush.msra.mxu0 %v594
        %1000 = vmatpush.msra.mxu0 %v587
        %1001 = vmatpush.msra.mxu0 %v580
        %1002 = vmatpush.msra.mxu0 %v573
        %1003 = vmatpush.msra.mxu0 %v566
        %1004 = vmatmul.f32.gmra.mxu0 %v338
        %v1005 = vpop.f32.mrf.mxu0
        %v1006 = vadd.f32 %v986, %v1005
        %1007 = vdwg.mxu0
        %1008 = vmatpush.msra.mxu0 %v783
        %1009 = vmatpush.msra.mxu0 %v776
        %1010 = vmatpush.msra.mxu0 %v769
        %1011 = vmatpush.msra.mxu0 %v762
        %1012 = vmatpush.msra.mxu0 %v755
        %1013 = vmatpush.msra.mxu0 %v748
        %1014 = vmatpush.msra.mxu0 %v741
        %1015 = vmatpush.msra.mxu0 %v734
        %1016 = vmatpush.msra.mxu0 %v727
        %1017 = vmatpush.msra.mxu0 %v720
        %1018 = vmatpush.msra.mxu0 %v713
        %1019 = vmatpush.msra.mxu0 %v706
        %1020 = vmatpush.msra.mxu0 %v699
        %1021 = vmatpush.msra.mxu0 %v692
        %1022 = vmatpush.msra.mxu0 %v685
        %1023 = vmatpush.msra.mxu0 %v678
        %1024 = vmatmul.f32.gmra.mxu0 %v339
        %v1025 = vpop.f32.mrf.mxu0
        %v1026 = vadd.f32 %v1006, %v1025
        %1027 = vdwg.mxu0
        %1028 = vmatpush.msra.mxu0 %v448
        %1029 = vmatpush.msra.mxu0 %v441
        %1030 = vmatpush.msra.mxu0 %v434
        %1031 = vmatpush.msra.mxu0 %v427
        %1032 = vmatpush.msra.mxu0 %v420
        %1033 = vmatpush.msra.mxu0 %v413
        %1034 = vmatpush.msra.mxu0 %v406
        %1035 = vmatpush.msra.mxu0 %v399
        %1036 = vmatpush.msra.mxu0 %v392
        %1037 = vmatpush.msra.mxu0 %v385
        %1038 = vmatpush.msra.mxu0 %v378
        %1039 = vmatpush.msra.mxu0 %v371
        %1040 = vmatpush.msra.mxu0 %v364
        %1041 = vmatpush.msra.mxu0 %v357
        %1042 = vmatpush.msra.mxu0 %v350
        %1043 = vmatpush.msra.mxu0 %v343
        %1044 = vmatmul.f32.gmra.mxu0 %v336
        %v1045 = vpop.f32.mrf.mxu0
        %v1046 = vadd.f32 0.0, %v1045
        %1047 = vdwg.mxu0
        %1048 = vmatpush.msra.mxu0 %v560
        %1049 = vmatpush.msra.mxu0 %v553
        %1050 = vmatpush.msra.mxu0 %v546
        %1051 = vmatpush.msra.mxu0 %v539
        %1052 = vmatpush.msra.mxu0 %v532
        %1053 = vmatpush.msra.mxu0 %v525
        %1054 = vmatpush.msra.mxu0 %v518
        %1055 = vmatpush.msra.mxu0 %v511
        %1056 = vmatpush.msra.mxu0 %v504
        %1057 = vmatpush.msra.mxu0 %v497
        %1058 = vmatpush.msra.mxu0 %v490
        %1059 = vmatpush.msra.mxu0 %v483
        %1060 = vmatpush.msra.mxu0 %v476
        %1061 = vmatpush.msra.mxu0 %v469
        %1062 = vmatpush.msra.mxu0 %v462
        %1063 = vmatpush.msra.mxu0 %v455
        %1064 = vmatmul.f32.gmra.mxu0 %v337
        %v1065 = vpop.f32.mrf.mxu0
        %v1066 = vadd.f32 %v1046, %v1065
        %1067 = vdwg.mxu0
        %1068 = vmatpush.msra.mxu0 %v672
        %1069 = vmatpush.msra.mxu0 %v665
        %1070 = vmatpush.msra.mxu0 %v658
        %1071 = vmatpush.msra.mxu0 %v651
        %1072 = vmatpush.msra.mxu0 %v644
        %1073 = vmatpush.msra.mxu0 %v637
        %1074 = vmatpush.msra.mxu0 %v630
        %1075 = vmatpush.msra.mxu0 %v623
        %1076 = vmatpush.msra.mxu0 %v616
        %1077 = vmatpush.msra.mxu0 %v609
        %1078 = vmatpush.msra.mxu0 %v602
        %1079 = vmatpush.msra.mxu0 %v595
        %1080 = vmatpush.msra.mxu0 %v588
        %1081 = vmatpush.msra.mxu0 %v581
        %1082 = vmatpush.msra.mxu0 %v574
        %1083 = vmatpush.msra.mxu0 %v567
        %1084 = vmatmul.f32.gmra.mxu0 %v338
        %v1085 = vpop.f32.mrf.mxu0
        %v1086 = vadd.f32 %v1066, %v1085
        %1087 = vdwg.mxu0
        %1088 = vmatpush.msra.mxu0 %v784
        %1089 = vmatpush.msra.mxu0 %v777
        %1090 = vmatpush.msra.mxu0 %v770
        %1091 = vmatpush.msra.mxu0 %v763
        %1092 = vmatpush.msra.mxu0 %v756
        %1093 = vmatpush.msra.mxu0 %v749
        %1094 = vmatpush.msra.mxu0 %v742
        %1095 = vmatpush.msra.mxu0 %v735
        %1096 = vmatpush.msra.mxu0 %v728
        %1097 = vmatpush.msra.mxu0 %v721
        %1098 = vmatpush.msra.mxu0 %v714
        %1099 = vmatpush.msra.mxu0 %v707
        %1100 = vmatpush.msra.mxu0 %v700
        %1101 = vmatpush.msra.mxu0 %v693
        %1102 = vmatpush.msra.mxu0 %v686
        %1103 = vmatpush.msra.mxu0 %v679
        %1104 = vmatmul.f32.gmra.mxu0 %v339
        %v1105 = vpop.f32.mrf.mxu0
        %v1106 = vadd.f32 %v1086, %v1105
        %1107 = vdwg.mxu0
        %1108 = vmatpush.msra.mxu0 %v449
        %1109 = vmatpush.msra.mxu0 %v442
        %1110 = vmatpush.msra.mxu0 %v435
        %1111 = vmatpush.msra.mxu0 %v428
        %1112 = vmatpush.msra.mxu0 %v421
        %1113 = vmatpush.msra.mxu0 %v414
        %1114 = vmatpush.msra.mxu0 %v407
        %1115 = vmatpush.msra.mxu0 %v400
        %1116 = vmatpush.msra.mxu0 %v393
        %1117 = vmatpush.msra.mxu0 %v386
        %1118 = vmatpush.msra.mxu0 %v379
        %1119 = vmatpush.msra.mxu0 %v372
        %1120 = vmatpush.msra.mxu0 %v365
        %1121 = vmatpush.msra.mxu0 %v358
        %1122 = vmatpush.msra.mxu0 %v351
        %1123 = vmatpush.msra.mxu0 %v344
        %1124 = vmatmul.f32.gmra.mxu0 %v336
        %v1125 = vpop.f32.mrf.mxu0
        %v1126 = vadd.f32 0.0, %v1125
        %1127 = vdwg.mxu0
        %1128 = vmatpush.msra.mxu0 %v561
        %1129 = vmatpush.msra.mxu0 %v554
        %1130 = vmatpush.msra.mxu0 %v547
        %1131 = vmatpush.msra.mxu0 %v540
        %1132 = vmatpush.msra.mxu0 %v533
        %1133 = vmatpush.msra.mxu0 %v526
        %1134 = vmatpush.msra.mxu0 %v519
        %1135 = vmatpush.msra.mxu0 %v512
        %1136 = vmatpush.msra.mxu0 %v505
        %1137 = vmatpush.msra.mxu0 %v498
        %1138 = vmatpush.msra.mxu0 %v491
        %1139 = vmatpush.msra.mxu0 %v484
        %1140 = vmatpush.msra.mxu0 %v477
        %1141 = vmatpush.msra.mxu0 %v470
        %1142 = vmatpush.msra.mxu0 %v463
        %1143 = vmatpush.msra.mxu0 %v456
        %1144 = vmatmul.f32.gmra.mxu0 %v337
        %v1145 = vpop.f32.mrf.mxu0
        %v1146 = vadd.f32 %v1126, %v1145
        %1147 = vdwg.mxu0
        %1148 = vmatpush.msra.mxu0 %v673
        %1149 = vmatpush.msra.mxu0 %v666
        %1150 = vmatpush.msra.mxu0 %v659
        %1151 = vmatpush.msra.mxu0 %v652
        %1152 = vmatpush.msra.mxu0 %v645
        %1153 = vmatpush.msra.mxu0 %v638
        %1154 = vmatpush.msra.mxu0 %v631
        %1155 = vmatpush.msra.mxu0 %v624
        %1156 = vmatpush.msra.mxu0 %v617
        %1157 = vmatpush.msra.mxu0 %v610
        %1158 = vmatpush.msra.mxu0 %v603
        %1159 = vmatpush.msra.mxu0 %v596
        %1160 = vmatpush.msra.mxu0 %v589
        %1161 = vmatpush.msra.mxu0 %v582
        %1162 = vmatpush.msra.mxu0 %v575
        %1163 = vmatpush.msra.mxu0 %v568
        %1164 = vmatmul.f32.gmra.mxu0 %v338
        %v1165 = vpop.f32.mrf.mxu0
        %v1166 = vadd.f32 %v1146, %v1165
        %1167 = vdwg.mxu0
        %1168 = vmatpush.msra.mxu0 %v785
        %1169 = vmatpush.msra.mxu0 %v778
        %1170 = vmatpush.msra.mxu0 %v771
        %1171 = vmatpush.msra.mxu0 %v764
        %1172 = vmatpush.msra.mxu0 %v757
        %1173 = vmatpush.msra.mxu0 %v750
        %1174 = vmatpush.msra.mxu0 %v743
        %1175 = vmatpush.msra.mxu0 %v736
        %1176 = vmatpush.msra.mxu0 %v729
        %1177 = vmatpush.msra.mxu0 %v722
        %1178 = vmatpush.msra.mxu0 %v715
        %1179 = vmatpush.msra.mxu0 %v708
        %1180 = vmatpush.msra.mxu0 %v701
        %1181 = vmatpush.msra.mxu0 %v694
        %1182 = vmatpush.msra.mxu0 %v687
        %1183 = vmatpush.msra.mxu0 %v680
        %1184 = vmatmul.f32.gmra.mxu0 %v339
        %v1185 = vpop.f32.mrf.mxu0
        %v1186 = vadd.f32 %v1166, %v1185
        %1187 = vdwg.mxu0
        %1188 = vmatpush.msra.mxu0 %v450
        %1189 = vmatpush.msra.mxu0 %v443
        %1190 = vmatpush.msra.mxu0 %v436
        %1191 = vmatpush.msra.mxu0 %v429
        %1192 = vmatpush.msra.mxu0 %v422
        %1193 = vmatpush.msra.mxu0 %v415
        %1194 = vmatpush.msra.mxu0 %v408
        %1195 = vmatpush.msra.mxu0 %v401
        %1196 = vmatpush.msra.mxu0 %v394
        %1197 = vmatpush.msra.mxu0 %v387
        %1198 = vmatpush.msra.mxu0 %v380
        %1199 = vmatpush.msra.mxu0 %v373
        %1200 = vmatpush.msra.mxu0 %v366
        %1201 = vmatpush.msra.mxu0 %v359
        %1202 = vmatpush.msra.mxu0 %v352
        %1203 = vmatpush.msra.mxu0 %v345
        %1204 = vmatmul.f32.gmra.mxu0 %v336
        %v1205 = vpop.f32.mrf.mxu0
        %v1206 = vadd.f32 0.0, %v1205
        %1207 = vdwg.mxu0
        %1208 = vmatpush.msra.mxu0 %v562
        %1209 = vmatpush.msra.mxu0 %v555
        %1210 = vmatpush.msra.mxu0 %v548
        %1211 = vmatpush.msra.mxu0 %v541
        %1212 = vmatpush.msra.mxu0 %v534
        %1213 = vmatpush.msra.mxu0 %v527
        %1214 = vmatpush.msra.mxu0 %v520
        %1215 = vmatpush.msra.mxu0 %v513
        %1216 = vmatpush.msra.mxu0 %v506
        %1217 = vmatpush.msra.mxu0 %v499
        %1218 = vmatpush.msra.mxu0 %v492
        %1219 = vmatpush.msra.mxu0 %v485
        %1220 = vmatpush.msra.mxu0 %v478
        %1221 = vmatpush.msra.mxu0 %v471
        %1222 = vmatpush.msra.mxu0 %v464
        %1223 = vmatpush.msra.mxu0 %v457
        %1224 = vmatmul.f32.gmra.mxu0 %v337
        %v1225 = vpop.f32.mrf.mxu0
        %v1226 = vadd.f32 %v1206, %v1225
        %1227 = vdwg.mxu0
        %1228 = vmatpush.msra.mxu0 %v674
        %1229 = vmatpush.msra.mxu0 %v667
        %1230 = vmatpush.msra.mxu0 %v660
        %1231 = vmatpush.msra.mxu0 %v653
        %1232 = vmatpush.msra.mxu0 %v646
        %1233 = vmatpush.msra.mxu0 %v639
        %1234 = vmatpush.msra.mxu0 %v632
        %1235 = vmatpush.msra.mxu0 %v625
        %1236 = vmatpush.msra.mxu0 %v618
        %1237 = vmatpush.msra.mxu0 %v611
        %1238 = vmatpush.msra.mxu0 %v604
        %1239 = vmatpush.msra.mxu0 %v597
        %1240 = vmatpush.msra.mxu0 %v590
        %1241 = vmatpush.msra.mxu0 %v583
        %1242 = vmatpush.msra.mxu0 %v576
        %1243 = vmatpush.msra.mxu0 %v569
        %1244 = vmatmul.f32.gmra.mxu0 %v338
        %v1245 = vpop.f32.mrf.mxu0
        %v1246 = vadd.f32 %v1226, %v1245
        %1247 = vdwg.mxu0
        %1248 = vmatpush.msra.mxu0 %v786
        %1249 = vmatpush.msra.mxu0 %v779
        %1250 = vmatpush.msra.mxu0 %v772
        %1251 = vmatpush.msra.mxu0 %v765
        %1252 = vmatpush.msra.mxu0 %v758
        %1253 = vmatpush.msra.mxu0 %v751
        %1254 = vmatpush.msra.mxu0 %v744
        %1255 = vmatpush.msra.mxu0 %v737
        %1256 = vmatpush.msra.mxu0 %v730
        %1257 = vmatpush.msra.mxu0 %v723
        %1258 = vmatpush.msra.mxu0 %v716
        %1259 = vmatpush.msra.mxu0 %v709
        %1260 = vmatpush.msra.mxu0 %v702
        %1261 = vmatpush.msra.mxu0 %v695
        %1262 = vmatpush.msra.mxu0 %v688
        %1263 = vmatpush.msra.mxu0 %v681
        %1264 = vmatmul.f32.gmra.mxu0 %v339
        %v1265 = vpop.f32.mrf.mxu0
        %v1266 = vadd.f32 %v1246, %v1265
        %1267 = vdwg.mxu0
        %1268 = vmatpush.msra.mxu0 %v451
        %1269 = vmatpush.msra.mxu0 %v444
        %1270 = vmatpush.msra.mxu0 %v437
        %1271 = vmatpush.msra.mxu0 %v430
        %1272 = vmatpush.msra.mxu0 %v423
        %1273 = vmatpush.msra.mxu0 %v416
        %1274 = vmatpush.msra.mxu0 %v409
        %1275 = vmatpush.msra.mxu0 %v402
        %1276 = vmatpush.msra.mxu0 %v395
        %1277 = vmatpush.msra.mxu0 %v388
        %1278 = vmatpush.msra.mxu0 %v381
        %1279 = vmatpush.msra.mxu0 %v374
        %1280 = vmatpush.msra.mxu0 %v367
        %1281 = vmatpush.msra.mxu0 %v360
        %1282 = vmatpush.msra.mxu0 %v353
        %1283 = vmatpush.msra.mxu0 %v346
        %1284 = vmatmul.f32.gmra.mxu0 %v336
        %v1285 = vpop.f32.mrf.mxu0
        %v1286 = vadd.f32 0.0, %v1285
        %1287 = vdwg.mxu0
        %1288 = vmatpush.msra.mxu0 %v563
        %1289 = vmatpush.msra.mxu0 %v556
        %1290 = vmatpush.msra.mxu0 %v549
        %1291 = vmatpush.msra.mxu0 %v542
        %1292 = vmatpush.msra.mxu0 %v535
        %1293 = vmatpush.msra.mxu0 %v528
        %1294 = vmatpush.msra.mxu0 %v521
        %1295 = vmatpush.msra.mxu0 %v514
        %1296 = vmatpush.msra.mxu0 %v507
        %1297 = vmatpush.msra.mxu0 %v500
        %1298 = vmatpush.msra.mxu0 %v493
        %1299 = vmatpush.msra.mxu0 %v486
        %1300 = vmatpush.msra.mxu0 %v479
        %1301 = vmatpush.msra.mxu0 %v472
        %1302 = vmatpush.msra.mxu0 %v465
        %1303 = vmatpush.msra.mxu0 %v458
        %1304 = vmatmul.f32.gmra.mxu0 %v337
        %v1305 = vpop.f32.mrf.mxu0
        %v1306 = vadd.f32 %v1286, %v1305
        %1307 = vdwg.mxu0
        %1308 = vmatpush.msra.mxu0 %v675
        %1309 = vmatpush.msra.mxu0 %v668
        %1310 = vmatpush.msra.mxu0 %v661
        %1311 = vmatpush.msra.mxu0 %v654
        %1312 = vmatpush.msra.mxu0 %v647
        %1313 = vmatpush.msra.mxu0 %v640
        %1314 = vmatpush.msra.mxu0 %v633
        %1315 = vmatpush.msra.mxu0 %v626
        %1316 = vmatpush.msra.mxu0 %v619
        %1317 = vmatpush.msra.mxu0 %v612
        %1318 = vmatpush.msra.mxu0 %v605
        %1319 = vmatpush.msra.mxu0 %v598
        %1320 = vmatpush.msra.mxu0 %v591
        %1321 = vmatpush.msra.mxu0 %v584
        %1322 = vmatpush.msra.mxu0 %v577
        %1323 = vmatpush.msra.mxu0 %v570
        %1324 = vmatmul.f32.gmra.mxu0 %v338
        %v1325 = vpop.f32.mrf.mxu0
        %v1326 = vadd.f32 %v1306, %v1325
        %1327 = vdwg.mxu0
        %1328 = vmatpush.msra.mxu0 %v787
        %1329 = vmatpush.msra.mxu0 %v780
        %1330 = vmatpush.msra.mxu0 %v773
        %1331 = vmatpush.msra.mxu0 %v766
        %1332 = vmatpush.msra.mxu0 %v759
        %1333 = vmatpush.msra.mxu0 %v752
        %1334 = vmatpush.msra.mxu0 %v745
        %1335 = vmatpush.msra.mxu0 %v738
        %1336 = vmatpush.msra.mxu0 %v731
        %1337 = vmatpush.msra.mxu0 %v724
        %1338 = vmatpush.msra.mxu0 %v717
        %1339 = vmatpush.msra.mxu0 %v710
        %1340 = vmatpush.msra.mxu0 %v703
        %1341 = vmatpush.msra.mxu0 %v696
        %1342 = vmatpush.msra.mxu0 %v689
        %1343 = vmatpush.msra.mxu0 %v682
        %1344 = vmatmul.f32.gmra.mxu0 %v339
        %v1345 = vpop.f32.mrf.mxu0
        %v1346 = vadd.f32 %v1326, %v1345
        %1347 = vdwg.mxu0
        %v1348 = vadd.f32 %v329, %v866
        %v1349 = vadd.f32 %v330, %v946
        %v1350 = vadd.f32 %v331, %v1026
        %v1351 = vadd.f32 %v332, %v1106
        %v1352 = vadd.f32 %v333, %v1186
        %v1353 = vadd.f32 %v334, %v1266
        %v1354 = vadd.f32 %v335, %v1346
        %1355 = vst [vmem:[#allocation8] sm:$0xff] %v1348
        %1356 = vst [vmem:[#allocation8 + $0x8] sm:$0xff] %v1349
        %1357 = vst [vmem:[#allocation8 + $0x10] sm:$0xff] %v1350
        %1358 = vst [vmem:[#allocation8 + $0x18] sm:$0xff] %v1351
        %1359 = vst [vmem:[#allocation8 + $0x20] sm:$0xff] %v1352
        %1360 = vst [vmem:[#allocation8 + $0x28] sm:$0xff] %v1353
        %1361 = vst [vmem:[#allocation8 + $0x30] sm:$0xff] %v1354
        %p1362 = scmp.eq.s32.totalorder %s30, 1
        // Predicated region
        $region53: #{tpu_custom_call.1} parent=31 // pred_check
          %p1363 = pneg %p1362
        $region54: #{tpu_custom_call.1} parent=31 // pred_check_branch
          %1365 = sbr.rel (%p1363) target = $region56
        $region55: #{tpu_custom_call.1} parent=31 // pred_region
          %v1366 = vld [vmem:[#allocation8] sm:$0xff]
          %v1367 = vld [vmem:[#allocation8 + $0x8] sm:$0xff]
          %v1368 = vld [vmem:[#allocation8 + $0x10] sm:$0xff]
          %v1369 = vld [vmem:[#allocation8 + $0x18] sm:$0xff]
          %v1370 = vld [vmem:[#allocation8 + $0x20] sm:$0xff]
          %v1371 = vld [vmem:[#allocation8 + $0x28] sm:$0xff]
          %v1372 = vld [vmem:[#allocation8 + $0x30] sm:$0xff]
          %v1373 = vld [vmem:[#allocation7] sm:$0xff]
          %v1375 = vperm.slane %v1373, 0
          %v1376 = vperm.slane %v1373, 1
          %v1377 = vperm.slane %v1373, 2
          %v1378 = vperm.slane %v1373, 3
          %v1379 = vperm.slane %v1373, 4
          %v1380 = vperm.slane %v1373, 5
          %v1381 = vperm.slane %v1373, 6
          %v1389 = vadd.f32 %v1366, %v1375
          %v1390 = vadd.f32 %v1367, %v1376
          %v1391 = vadd.f32 %v1368, %v1377
          %v1392 = vadd.f32 %v1369, %v1378
          %v1393 = vadd.f32 %v1370, %v1379
          %v1394 = vadd.f32 %v1371, %v1380
          %v1395 = vadd.f32 %v1372, %v1381
          %v1396 = vmul.f32 %v1389, 0.5
          %v1397 = vmul.f32 %v1390, 0.5
          %v1398 = vmul.f32 %v1391, 0.5
          %v1399 = vmul.f32 %v1392, 0.5
          %v1400 = vmul.f32 %v1393, 0.5
          %v1401 = vmul.f32 %v1394, 0.5
          %v1402 = vmul.f32 %v1395, 0.5
          %v1403 = vmul.f32 %v1389, 0.70710677
          %v1404 = vmul.f32 %v1390, 0.70710677
          %v1405 = vmul.f32 %v1391, 0.70710677
          %v1406 = vmul.f32 %v1392, 0.70710677
          %v1407 = vmul.f32 %v1393, 0.70710677
          %v1408 = vmul.f32 %v1394, 0.70710677
          %v1409 = vmul.f32 %v1395, 0.70710677
          %v1410 = vmul.f32 %v1403, %v1403
          %v1411 = vmin.f32 16.0, %v1410
          %v1412 = vmul.f32 %v1411, 2.1237322e-06
          %v1413 = vadd.f32 %v1412, 0.00028619796
          %v1414 = vmul.f32 %v1411, %v1413
          %v1415 = vadd.f32 %v1414, 0.0036580483
          %v1416 = vmul.f32 %v1411, %v1415
          %v1417 = vadd.f32 %v1416, 0.05243302
          %v1418 = vmul.f32 %v1411, %v1417
          %v1419 = vadd.f32 %v1418, 0.18741608
          %v1420 = vmul.f32 %v1411, %v1419
          %v1421 = vadd.f32 %v1420, 1.1283791
          %v1422 = vmul.f32 %v1403, %v1421
          %v1423 = vmul.f32 %v1411, 3.8918573e-05
          %v1424 = vadd.f32 %v1423, 0.001143296
          %v1425 = vmul.f32 %v1411, %v1424
          %v1426 = vadd.f32 %v1425, 0.014752088
          %v1427 = vmul.f32 %v1411, %v1426
          %v1428 = vadd.f32 %v1427, 0.112945676
          %v1429 = vmul.f32 %v1411, %v1428
          %v1430 = vadd.f32 %v1429, 0.4994258
          %v1431 = vmul.f32 %v1411, %v1430
          %v1432 = vadd.f32 %v1431, 1.0
          %v1433 = vrcp.pop %v1432
          %v1434 = vmul.f32 %v1432, %v1433
          %v1435 = vsub.f32 1.0, %v1434
          %v1436 = vmul.f32 %v1433, %v1435
          %v1437 = vadd.f32 %v1433, %v1436
          %vm1438 = vweird.f32 %v1432
          %vm1439 = vweird.f32 %v1433
          %vm1440 = vmor %vm1438, %vm1439
          %v1441 = vsel %vm1440, %v1433, %v1437
          %v1442 = vand.u32 2147483647, %v1432
          %vm1443 = vcmp.eq.f32.partialorder %v1442, 8.507059e+37
          %v1444 = vand.u32 %v1432, 2147483648
          %v1445 = vor.u32 1.1754944e-38, %v1444
          %v1446 = vsel %vm1443, %v1445, %v1441
          %v1447 = vmul.f32 %v1422, %v1446
          %v1448 = vmin.f32 %v1447, 1.0
          %v1449 = vmax.f32 %v1448, -1.0
          %v1450 = vmul.f32 %v1404, %v1404
          %v1451 = vmin.f32 16.0, %v1450
          %v1452 = vmul.f32 %v1451, 2.1237322e-06
          %v1453 = vadd.f32 %v1452, 0.00028619796
          %v1454 = vmul.f32 %v1451, %v1453
          %v1455 = vadd.f32 %v1454, 0.0036580483
          %v1456 = vmul.f32 %v1451, %v1455
          %v1457 = vadd.f32 %v1456, 0.05243302
          %v1458 = vmul.f32 %v1451, %v1457
          %v1459 = vadd.f32 %v1458, 0.18741608
          %v1460 = vmul.f32 %v1451, %v1459
          %v1461 = vadd.f32 %v1460, 1.1283791
          %v1462 = vmul.f32 %v1404, %v1461
          %v1463 = vmul.f32 %v1451, 3.8918573e-05
          %v1464 = vadd.f32 %v1463, 0.001143296
          %v1465 = vmul.f32 %v1451, %v1464
          %v1466 = vadd.f32 %v1465, 0.014752088
          %v1467 = vmul.f32 %v1451, %v1466
          %v1468 = vadd.f32 %v1467, 0.112945676
          %v1469 = vmul.f32 %v1451, %v1468
          %v1470 = vadd.f32 %v1469, 0.4994258
          %v1471 = vmul.f32 %v1451, %v1470
          %v1472 = vadd.f32 %v1471, 1.0
          %v1473 = vrcp.pop %v1472
          %v1474 = vmul.f32 %v1472, %v1473
          %v1475 = vsub.f32 1.0, %v1474
          %v1476 = vmul.f32 %v1473, %v1475
          %v1477 = vadd.f32 %v1473, %v1476
          %vm1478 = vweird.f32 %v1472
          %vm1479 = vweird.f32 %v1473
          %vm1480 = vmor %vm1478, %vm1479
          %v1481 = vsel %vm1480, %v1473, %v1477
          %v1482 = vand.u32 2147483647, %v1472
          %vm1483 = vcmp.eq.f32.partialorder %v1482, 8.507059e+37
          %v1484 = vand.u32 %v1472, 2147483648
          %v1485 = vor.u32 1.1754944e-38, %v1484
          %v1486 = vsel %vm1483, %v1485, %v1481
          %v1487 = vmul.f32 %v1462, %v1486
          %v1488 = vmin.f32 %v1487, 1.0
          %v1489 = vmax.f32 %v1488, -1.0
          %v1490 = vmul.f32 %v1405, %v1405
          %v1491 = vmin.f32 16.0, %v1490
          %v1492 = vmul.f32 %v1491, 2.1237322e-06
          %v1493 = vadd.f32 %v1492, 0.00028619796
          %v1494 = vmul.f32 %v1491, %v1493
          %v1495 = vadd.f32 %v1494, 0.0036580483
          %v1496 = vmul.f32 %v1491, %v1495
          %v1497 = vadd.f32 %v1496, 0.05243302
          %v1498 = vmul.f32 %v1491, %v1497
          %v1499 = vadd.f32 %v1498, 0.18741608
          %v1500 = vmul.f32 %v1491, %v1499
          %v1501 = vadd.f32 %v1500, 1.1283791
          %v1502 = vmul.f32 %v1405, %v1501
          %v1503 = vmul.f32 %v1491, 3.8918573e-05
          %v1504 = vadd.f32 %v1503, 0.001143296
          %v1505 = vmul.f32 %v1491, %v1504
          %v1506 = vadd.f32 %v1505, 0.014752088
          %v1507 = vmul.f32 %v1491, %v1506
          %v1508 = vadd.f32 %v1507, 0.112945676
          %v1509 = vmul.f32 %v1491, %v1508
          %v1510 = vadd.f32 %v1509, 0.4994258
          %v1511 = vmul.f32 %v1491, %v1510
          %v1512 = vadd.f32 %v1511, 1.0
          %v1513 = vrcp.pop %v1512
          %v1514 = vmul.f32 %v1512, %v1513
          %v1515 = vsub.f32 1.0, %v1514
          %v1516 = vmul.f32 %v1513, %v1515
          %v1517 = vadd.f32 %v1513, %v1516
          %vm1518 = vweird.f32 %v1512
          %vm1519 = vweird.f32 %v1513
          %vm1520 = vmor %vm1518, %vm1519
          %v1521 = vsel %vm1520, %v1513, %v1517
          %v1522 = vand.u32 2147483647, %v1512
          %vm1523 = vcmp.eq.f32.partialorder %v1522, 8.507059e+37
          %v1524 = vand.u32 %v1512, 2147483648
          %v1525 = vor.u32 1.1754944e-38, %v1524
          %v1526 = vsel %vm1523, %v1525, %v1521
          %v1527 = vmul.f32 %v1502, %v1526
          %v1528 = vmin.f32 %v1527, 1.0
          %v1529 = vmax.f32 %v1528, -1.0
          %v1530 = vmul.f32 %v1406, %v1406
          %v1531 = vmin.f32 16.0, %v1530
          %v1532 = vmul.f32 %v1531, 2.1237322e-06
          %v1533 = vadd.f32 %v1532, 0.00028619796
          %v1534 = vmul.f32 %v1531, %v1533
          %v1535 = vadd.f32 %v1534, 0.0036580483
          %v1536 = vmul.f32 %v1531, %v1535
          %v1537 = vadd.f32 %v1536, 0.05243302
          %v1538 = vmul.f32 %v1531, %v1537
          %v1539 = vadd.f32 %v1538, 0.18741608
          %v1540 = vmul.f32 %v1531, %v1539
          %v1541 = vadd.f32 %v1540, 1.1283791
          %v1542 = vmul.f32 %v1406, %v1541
          %v1543 = vmul.f32 %v1531, 3.8918573e-05
          %v1544 = vadd.f32 %v1543, 0.001143296
          %v1545 = vmul.f32 %v1531, %v1544
          %v1546 = vadd.f32 %v1545, 0.014752088
          %v1547 = vmul.f32 %v1531, %v1546
          %v1548 = vadd.f32 %v1547, 0.112945676
          %v1549 = vmul.f32 %v1531, %v1548
          %v1550 = vadd.f32 %v1549, 0.4994258
          %v1551 = vmul.f32 %v1531, %v1550
          %v1552 = vadd.f32 %v1551, 1.0
          %v1553 = vrcp.pop %v1552
          %v1554 = vmul.f32 %v1552, %v1553
          %v1555 = vsub.f32 1.0, %v1554
          %v1556 = vmul.f32 %v1553, %v1555
          %v1557 = vadd.f32 %v1553, %v1556
          %vm1558 = vweird.f32 %v1552
          %vm1559 = vweird.f32 %v1553
          %vm1560 = vmor %vm1558, %vm1559
          %v1561 = vsel %vm1560, %v1553, %v1557
          %v1562 = vand.u32 2147483647, %v1552
          %vm1563 = vcmp.eq.f32.partialorder %v1562, 8.507059e+37
          %v1564 = vand.u32 %v1552, 2147483648
          %v1565 = vor.u32 1.1754944e-38, %v1564
          %v1566 = vsel %vm1563, %v1565, %v1561
          %v1567 = vmul.f32 %v1542, %v1566
          %v1568 = vmin.f32 %v1567, 1.0
          %v1569 = vmax.f32 %v1568, -1.0
          %v1570 = vmul.f32 %v1407, %v1407
          %v1571 = vmin.f32 16.0, %v1570
          %v1572 = vmul.f32 %v1571, 2.1237322e-06
          %v1573 = vadd.f32 %v1572, 0.00028619796
          %v1574 = vmul.f32 %v1571, %v1573
          %v1575 = vadd.f32 %v1574, 0.0036580483
          %v1576 = vmul.f32 %v1571, %v1575
          %v1577 = vadd.f32 %v1576, 0.05243302
          %v1578 = vmul.f32 %v1571, %v1577
          %v1579 = vadd.f32 %v1578, 0.18741608
          %v1580 = vmul.f32 %v1571, %v1579
          %v1581 = vadd.f32 %v1580, 1.1283791
          %v1582 = vmul.f32 %v1407, %v1581
          %v1583 = vmul.f32 %v1571, 3.8918573e-05
          %v1584 = vadd.f32 %v1583, 0.001143296
          %v1585 = vmul.f32 %v1571, %v1584
          %v1586 = vadd.f32 %v1585, 0.014752088
          %v1587 = vmul.f32 %v1571, %v1586
          %v1588 = vadd.f32 %v1587, 0.112945676
          %v1589 = vmul.f32 %v1571, %v1588
          %v1590 = vadd.f32 %v1589, 0.4994258
          %v1591 = vmul.f32 %v1571, %v1590
          %v1592 = vadd.f32 %v1591, 1.0
          %v1593 = vrcp.pop %v1592
          %v1594 = vmul.f32 %v1592, %v1593
          %v1595 = vsub.f32 1.0, %v1594
          %v1596 = vmul.f32 %v1593, %v1595
          %v1597 = vadd.f32 %v1593, %v1596
          %vm1598 = vweird.f32 %v1592
          %vm1599 = vweird.f32 %v1593
          %vm1600 = vmor %vm1598, %vm1599
          %v1601 = vsel %vm1600, %v1593, %v1597
          %v1602 = vand.u32 2147483647, %v1592
          %vm1603 = vcmp.eq.f32.partialorder %v1602, 8.507059e+37
          %v1604 = vand.u32 %v1592, 2147483648
          %v1605 = vor.u32 1.1754944e-38, %v1604
          %v1606 = vsel %vm1603, %v1605, %v1601
          %v1607 = vmul.f32 %v1582, %v1606
          %v1608 = vmin.f32 %v1607, 1.0
          %v1609 = vmax.f32 %v1608, -1.0
          %v1610 = vmul.f32 %v1408, %v1408
          %v1611 = vmin.f32 16.0, %v1610
          %v1612 = vmul.f32 %v1611, 2.1237322e-06
          %v1613 = vadd.f32 %v1612, 0.00028619796
          %v1614 = vmul.f32 %v1611, %v1613
          %v1615 = vadd.f32 %v1614, 0.0036580483
          %v1616 = vmul.f32 %v1611, %v1615
          %v1617 = vadd.f32 %v1616, 0.05243302
          %v1618 = vmul.f32 %v1611, %v1617
          %v1619 = vadd.f32 %v1618, 0.18741608
          %v1620 = vmul.f32 %v1611, %v1619
          %v1621 = vadd.f32 %v1620, 1.1283791
          %v1622 = vmul.f32 %v1408, %v1621
          %v1623 = vmul.f32 %v1611, 3.8918573e-05
          %v1624 = vadd.f32 %v1623, 0.001143296
          %v1625 = vmul.f32 %v1611, %v1624
          %v1626 = vadd.f32 %v1625, 0.014752088
          %v1627 = vmul.f32 %v1611, %v1626
          %v1628 = vadd.f32 %v1627, 0.112945676
          %v1629 = vmul.f32 %v1611, %v1628
          %v1630 = vadd.f32 %v1629, 0.4994258
          %v1631 = vmul.f32 %v1611, %v1630
          %v1632 = vadd.f32 %v1631, 1.0
          %v1633 = vrcp.pop %v1632
          %v1634 = vmul.f32 %v1632, %v1633
          %v1635 = vsub.f32 1.0, %v1634
          %v1636 = vmul.f32 %v1633, %v1635
          %v1637 = vadd.f32 %v1633, %v1636
          %vm1638 = vweird.f32 %v1632
          %vm1639 = vweird.f32 %v1633
          %vm1640 = vmor %vm1638, %vm1639
          %v1641 = vsel %vm1640, %v1633, %v1637
          %v1642 = vand.u32 2147483647, %v1632
          %vm1643 = vcmp.eq.f32.partialorder %v1642, 8.507059e+37
          %v1644 = vand.u32 %v1632, 2147483648
          %v1645 = vor.u32 1.1754944e-38, %v1644
          %v1646 = vsel %vm1643, %v1645, %v1641
          %v1647 = vmul.f32 %v1622, %v1646
          %v1648 = vmin.f32 %v1647, 1.0
          %v1649 = vmax.f32 %v1648, -1.0
          %v1650 = vmul.f32 %v1409, %v1409
          %v1651 = vmin.f32 16.0, %v1650
          %v1652 = vmul.f32 %v1651, 2.1237322e-06
          %v1653 = vadd.f32 %v1652, 0.00028619796
          %v1654 = vmul.f32 %v1651, %v1653
          %v1655 = vadd.f32 %v1654, 0.0036580483
          %v1656 = vmul.f32 %v1651, %v1655
          %v1657 = vadd.f32 %v1656, 0.05243302
          %v1658 = vmul.f32 %v1651, %v1657
          %v1659 = vadd.f32 %v1658, 0.18741608
          %v1660 = vmul.f32 %v1651, %v1659
          %v1661 = vadd.f32 %v1660, 1.1283791
          %v1662 = vmul.f32 %v1409, %v1661
          %v1663 = vmul.f32 %v1651, 3.8918573e-05
          %v1664 = vadd.f32 %v1663, 0.001143296
          %v1665 = vmul.f32 %v1651, %v1664
          %v1666 = vadd.f32 %v1665, 0.014752088
          %v1667 = vmul.f32 %v1651, %v1666
          %v1668 = vadd.f32 %v1667, 0.112945676
          %v1669 = vmul.f32 %v1651, %v1668
          %v1670 = vadd.f32 %v1669, 0.4994258
          %v1671 = vmul.f32 %v1651, %v1670
          %v1672 = vadd.f32 %v1671, 1.0
          %v1673 = vrcp.pop %v1672
          %v1674 = vmul.f32 %v1672, %v1673
          %v1675 = vsub.f32 1.0, %v1674
          %v1676 = vmul.f32 %v1673, %v1675
          %v1677 = vadd.f32 %v1673, %v1676
          %vm1678 = vweird.f32 %v1672
          %vm1679 = vweird.f32 %v1673
          %vm1680 = vmor %vm1678, %vm1679
          %v1681 = vsel %vm1680, %v1673, %v1677
          %v1682 = vand.u32 2147483647, %v1672
          %vm1683 = vcmp.eq.f32.partialorder %v1682, 8.507059e+37
          %v1684 = vand.u32 %v1672, 2147483648
          %v1685 = vor.u32 1.1754944e-38, %v1684
          %v1686 = vsel %vm1683, %v1685, %v1681
          %v1687 = vmul.f32 %v1662, %v1686
          %v1688 = vmin.f32 %v1687, 1.0
          %v1689 = vmax.f32 %v1688, -1.0
          %v1690 = vadd.f32 %v1449, 1.0
          %v1691 = vadd.f32 %v1489, 1.0
          %v1692 = vadd.f32 %v1529, 1.0
          %v1693 = vadd.f32 %v1569, 1.0
          %v1694 = vadd.f32 %v1609, 1.0
          %v1695 = vadd.f32 %v1649, 1.0
          %v1696 = vadd.f32 %v1689, 1.0
          %v1697 = vmul.f32 %v1396, %v1690
          %v1698 = vmul.f32 %v1397, %v1691
          %v1699 = vmul.f32 %v1398, %v1692
          %v1700 = vmul.f32 %v1399, %v1693
          %v1701 = vmul.f32 %v1400, %v1694
          %v1702 = vmul.f32 %v1401, %v1695
          %v1703 = vmul.f32 %v1402, %v1696
          %v1704 = vlaneseq
          %v1705 = vshrl.u32 %v1704, 7
          %s1706 = smul.u32 %s29, 8
          %v1707 = vstv %s1706
          %v1708 = vadd.s32 %v1705, %v1707
          %vm1709 = vcmp.lt.s32.totalorder %v1708, 2
          %v1710 = vsel %vm1709, 1, 0
          %vm1711 = vcmp.eq.s32.totalorder %v1710, 1
          %v1712 = vsel %vm1711, %v1697, 0.0
          %v1713 = vsel %vm1711, %v1698, 0.0
          %v1714 = vsel %vm1711, %v1699, 0.0
          %v1715 = vsel %vm1711, %v1700, 0.0
          %v1716 = vsel %vm1711, %v1701, 0.0
          %v1717 = vsel %vm1711, %v1702, 0.0
          %v1718 = vsel %vm1711, %v1703, 0.0
          %1719 = vst [vmem:[#allocation8] sm:$0xff] %v1712
          %1720 = vst [vmem:[#allocation8 + $0x8] sm:$0xff] %v1713
          %1721 = vst [vmem:[#allocation8 + $0x10] sm:$0xff] %v1714
          %1722 = vst [vmem:[#allocation8 + $0x18] sm:$0xff] %v1715
          %1723 = vst [vmem:[#allocation8 + $0x20] sm:$0xff] %v1716
          %1724 = vst [vmem:[#allocation8 + $0x28] sm:$0xff] %v1717
          %1725 = vst [vmem:[#allocation8 + $0x30] sm:$0xff] %v1718
          %v1726 = vld [vmem:[#allocation9] sm:$0xff]
          %v1727 = vrot.slane %v1712, 4
          %v1728 = vadd.f32 %v1712, %v1727
          %v1729 = vrot.slane %v1728, 2
          %v1730 = vadd.f32 %v1728, %v1729
          %v1731 = vrot.slane %v1730, 1
          %v1732 = vadd.f32 %v1730, %v1731
          %v1733 = vrot.slane %v1713, 4
          %v1734 = vadd.f32 %v1713, %v1733
          %v1735 = vrot.slane %v1734, 2
          %v1736 = vadd.f32 %v1734, %v1735
          %v1737 = vrot.slane %v1736, 1
          %v1738 = vadd.f32 %v1736, %v1737
          %v1739 = vrot.slane %v1714, 4
          %v1740 = vadd.f32 %v1714, %v1739
          %v1741 = vrot.slane %v1740, 2
          %v1742 = vadd.f32 %v1740, %v1741
          %v1743 = vrot.slane %v1742, 1
          %v1744 = vadd.f32 %v1742, %v1743
          %v1745 = vrot.slane %v1715, 4
          %v1746 = vadd.f32 %v1715, %v1745
          %v1747 = vrot.slane %v1746, 2
          %v1748 = vadd.f32 %v1746, %v1747
          %v1749 = vrot.slane %v1748, 1
          %v1750 = vadd.f32 %v1748, %v1749
          %v1751 = vrot.slane %v1716, 4
          %v1752 = vadd.f32 %v1716, %v1751
          %v1753 = vrot.slane %v1752, 2
          %v1754 = vadd.f32 %v1752, %v1753
          %v1755 = vrot.slane %v1754, 1
          %v1756 = vadd.f32 %v1754, %v1755
          %v1757 = vrot.slane %v1717, 4
          %v1758 = vadd.f32 %v1717, %v1757
          %v1759 = vrot.slane %v1758, 2
          %v1760 = vadd.f32 %v1758, %v1759
          %v1761 = vrot.slane %v1760, 1
          %v1762 = vadd.f32 %v1760, %v1761
          %v1763 = vrot.slane %v1718, 4
          %v1764 = vadd.f32 %v1718, %v1763
          %v1765 = vrot.slane %v1764, 2
          %v1766 = vadd.f32 %v1764, %v1765
          %v1767 = vrot.slane %v1766, 1
          %v1768 = vadd.f32 %v1766, %v1767
          %v1776 = vrot.slane %v1738, 7
          %v1777 = vrot.slane %v1744, 6
          %v1778 = vrot.slane %v1750, 5
          %v1779 = vrot.slane %v1756, 4
          %v1780 = vrot.slane %v1762, 3
          %v1781 = vrot.slane %v1768, 2
          %vm1782 = vcmask 1040384
          %v1783 = vsel %vm1782, %v1732, %v1776
          %vm1784 = vcmask 1042434
          %v1785 = vsel %vm1784, %v1777, %v1778
          %vm1786 = vcmask 1041408
          %v1787 = vsel %vm1786, %v1783, %v1785
          %vm1788 = vcmask 1044484
          %v1789 = vsel %vm1788, %v1779, %v1780
          %vm1790 = vcmask 1045508
          %v1791 = vsel %vm1790, %v1789, %v1781
          %vm1792 = vcmask 1043456
          %v1793 = vsel %vm1792, %v1787, %v1791
          %v1795 = vadd.f32 %v1726, %v1793
          %v1796 = vlaneseq
          %vm1797 = vcmp.ge.s32.totalorder %v1796, 0
          %vm1798 = vcmp.lt.s32.totalorder %v1796, 896
          %vm1799 = vmand %vm1797, %vm1798
          %1800 = vst.msk [vmem:[#allocation9] sm:$0x7f] %vm1799, %v1795
          %v1801 = vld [vmem:[#allocation11] sm:$0xff]
          %v1802 = vmul.f32 %v1712, %v1712
          %v1803 = vmul.f32 %v1713, %v1713
          %v1804 = vmul.f32 %v1714, %v1714
          %v1805 = vmul.f32 %v1715, %v1715
          %v1806 = vmul.f32 %v1716, %v1716
          %v1807 = vmul.f32 %v1717, %v1717
          %v1808 = vmul.f32 %v1718, %v1718
          %v1809 = vrot.slane %v1802, 4
          %v1810 = vadd.f32 %v1802, %v1809
          %v1811 = vrot.slane %v1810, 2
          %v1812 = vadd.f32 %v1810, %v1811
          %v1813 = vrot.slane %v1812, 1
          %v1814 = vadd.f32 %v1812, %v1813
          %v1815 = vrot.slane %v1803, 4
          %v1816 = vadd.f32 %v1803, %v1815
          %v1817 = vrot.slane %v1816, 2
          %v1818 = vadd.f32 %v1816, %v1817
          %v1819 = vrot.slane %v1818, 1
          %v1820 = vadd.f32 %v1818, %v1819
          %v1821 = vrot.slane %v1804, 4
          %v1822 = vadd.f32 %v1804, %v1821
          %v1823 = vrot.slane %v1822, 2
          %v1824 = vadd.f32 %v1822, %v1823
          %v1825 = vrot.slane %v1824, 1
          %v1826 = vadd.f32 %v1824, %v1825
          %v1827 = vrot.slane %v1805, 4
          %v1828 = vadd.f32 %v1805, %v1827
          %v1829 = vrot.slane %v1828, 2
          %v1830 = vadd.f32 %v1828, %v1829
          %v1831 = vrot.slane %v1830, 1
          %v1832 = vadd.f32 %v1830, %v1831
          %v1833 = vrot.slane %v1806, 4
          %v1834 = vadd.f32 %v1806, %v1833
          %v1835 = vrot.slane %v1834, 2
          %v1836 = vadd.f32 %v1834, %v1835
          %v1837 = vrot.slane %v1836, 1
          %v1838 = vadd.f32 %v1836, %v1837
          %v1839 = vrot.slane %v1807, 4
          %v1840 = vadd.f32 %v1807, %v1839
          %v1841 = vrot.slane %v1840, 2
          %v1842 = vadd.f32 %v1840, %v1841
          %v1843 = vrot.slane %v1842, 1
          %v1844 = vadd.f32 %v1842, %v1843
          %v1845 = vrot.slane %v1808, 4
          %v1846 = vadd.f32 %v1808, %v1845
          %v1847 = vrot.slane %v1846, 2
          %v1848 = vadd.f32 %v1846, %v1847
          %v1849 = vrot.slane %v1848, 1
          %v1850 = vadd.f32 %v1848, %v1849
          %v1858 = vrot.slane %v1820, 7
          %v1859 = vrot.slane %v1826, 6
          %v1860 = vrot.slane %v1832, 5
          %v1861 = vrot.slane %v1838, 4
          %v1862 = vrot.slane %v1844, 3
          %v1863 = vrot.slane %v1850, 2
          %v1864 = vsel %vm1782, %v1814, %v1858
          %v1865 = vsel %vm1784, %v1859, %v1860
          %v1866 = vsel %vm1786, %v1864, %v1865
          %v1867 = vsel %vm1788, %v1861, %v1862
          %v1868 = vsel %vm1790, %v1867, %v1863
          %v1869 = vsel %vm1792, %v1866, %v1868
          %v1871 = vadd.f32 %v1801, %v1869
          %1872 = vst.msk [vmem:[#allocation11] sm:$0x7f] %vm1799, %v1871
        $region56: #{tpu_custom_call.1} parent=31 // pred_fallthru
          _
        // Predicated region
        $region57: #{tpu_custom_call.1} parent=31 // pred_check
          %p1873 = pneg %p130
        $region58: #{tpu_custom_call.1} parent=31 // pred_check_branch
          %1875 = sbr.rel (%p1873) target = $region60
        $region59: #{tpu_custom_call.1} parent=31 // pred_region
          %1877 = vsyncadd [#allocation4], 0
          %s1878 = smul.addr %s29, 7
          %s1879 = smul.addr %s1878, 8
          %s1880 = scalar_lea.hbm %s3, %s1879
          %s1882 = sshll.u32 [#allocation8], 4
          %s1883 = int_to_ptr.vmem [resolvable:$true] %s1882
          %s1884 = sshll.u32 %s1880, 4
          %s1885 = int_to_ptr.hbm [resolvable:$true] %s1884
          %1887 = dma.vmem_to_hbm [thread:$0]  %s1883, 896, %s1885, [#allocation4]
        $region60: #{tpu_custom_call.1} parent=31 // pred_fallthru
          _
        // Predicated region
        $region61: #{tpu_custom_call.1} parent=31 // pred_check
          %p1888 = pneg %p151
        $region62: #{tpu_custom_call.1} parent=31 // pred_check_branch
          %1890 = sbr.rel (%p1888) target = $region64
        $region63: #{tpu_custom_call.1} parent=31 // pred_region
          %1892 = vsyncadd [#allocation10], 0
          %s1894 = sshll.u32 [#allocation9], 4
          %s1895 = int_to_ptr.vmem [resolvable:$true] %s1894
          %s1896 = sshll.u32 %s4, 4
          %s1897 = int_to_ptr.hbm [resolvable:$true] %s1896
          %1899 = dma.vmem_to_hbm [thread:$0]  %s1895, 112, %s1897, [#allocation10]
        $region64: #{tpu_custom_call.1} parent=31 // pred_fallthru
          _
        // Predicated region
        $region65: #{tpu_custom_call.1} parent=31 // pred_check
          %p1900 = pneg %p172
        $region66: #{tpu_custom_call.1} parent=31 // pred_check_branch
          %1902 = sbr.rel (%p1900) target = $region68
        $region67: #{tpu_custom_call.1} parent=31 // pred_region
          %1904 = vsyncadd [#allocation10], 0
          %s1906 = sshll.u32 [#allocation11], 4
          %s1907 = int_to_ptr.vmem [resolvable:$true] %s1906
          %s1908 = sshll.u32 %s5, 4
          %s1909 = int_to_ptr.hbm [resolvable:$true] %s1908
          %1911 = dma.vmem_to_hbm [thread:$0]  %s1907, 112, %s1909, [#allocation10]
        $region68: #{tpu_custom_call.1} parent=31 // pred_fallthru
          _
        // Predicated region
        $region69: #{tpu_custom_call.1} parent=31 // pred_check
          %p1912 = pneg %p130
        $region70: #{tpu_custom_call.1} parent=31 // pred_check_branch
          %1914 = sbr.rel (%p1912) target = $region72
        $region71: #{tpu_custom_call.1} parent=31 // pred_region
          %1916 = dma.done [#allocation4], 896
        $region72: #{tpu_custom_call.1} parent=31 // pred_fallthru
          _
        // Predicated region
        $region73: #{tpu_custom_call.1} parent=31 // pred_check
          %p1917 = pneg %p151
        $region74: #{tpu_custom_call.1} parent=31 // pred_check_branch
          %1919 = sbr.rel (%p1917) target = $region76
        $region75: #{tpu_custom_call.1} parent=31 // pred_region
          %1921 = dma.done [#allocation10], 112
        $region76: #{tpu_custom_call.1} parent=31 // pred_fallthru
          _
        // Predicated region
        $region77: #{tpu_custom_call.1} parent=31 // pred_check
          %p1922 = pneg %p172
        $region78: #{tpu_custom_call.1} parent=31 // pred_check_branch
          %1924 = sbr.rel (%p1922) target = $region80
        $region79: #{tpu_custom_call.1} parent=31 // pred_region
          %1926 = dma.done [#allocation10], 112
        $region80: #{tpu_custom_call.1} parent=31 // pred_fallthru
          _
      $region32: #{tpu_custom_call.1} parent=5 // pred_fallthru
        _
      %p1927 = scmp.le.s32.totalorder 2, %s20
      // Predicated region
      $region81: #{tpu_custom_call.1} parent=5 // pred_check
        %p1928 = pneg %p1927
      $region82: #{tpu_custom_call.1} parent=5 // pred_check_branch
        %1930 = sbr.rel (%p1928) target = $region84
      $region83: #{tpu_custom_call.1} parent=5 // pred_region
        %s1931 = ssub.s32 %s20, 2
      $region84: #{tpu_custom_call.1} parent=5 // pred_fallthru
        _
    $region6: #{tpu_custom_call.1} parent=1 // loop_footer
      %s24 = sadd.s32 1, %s20
    $region7: #{tpu_custom_call.1} parent=1 // loop_footer_branch
      %19 = sbr.rel target = $region3
    $region8: #{tpu_custom_call.1} parent=1 // loop_exit
      _
    %1932 = vsyncpa [#allocation3], 1
    %s1933 = scalar_lea.sflag [#allocation3], 1
    %1934 = vsyncpa %s1933, 1
    %1935 = vsyncpa [#allocation6], 1
    %s1936 = scalar_lea.sflag [#allocation6], 1
    %1937 = vsyncpa %s1936, 1
    %1938 = vsyncpa [#allocation4], 1
    %s1939 = scalar_lea.sflag [#allocation4], 1
    %1940 = vsyncpa %s1939, 1
    %1941 = vsyncpa [#allocation10], 1

</llo_original>
